<compile_context>
chip_gen: v5e
topology: v5e:2x2
jax: 0.10.0
libtpu: 0.0.40
codegen_flags: <defaults>
</compile_context>

<pallas_src>
import functools

import jax
import jax.numpy as jnp
from jax.experimental import pallas as pl
from jax.experimental.pallas import tpu as pltpu

_LANE = 128
_BN_EPS = 1e-5
_LRELU_SLOPE = 0.01   # F.leaky_relu default negative slope


def _round_up(v, m):
    return ((v + m - 1) // m) * m


def _default_row_tile():
    # v6e/v7x MXU is 256x256 -> tm=256; v5e MXU is 128x128 -> tm=128.
    try:
        kind = jax.devices()[0].device_kind.lower()
        if "v5 lite" in kind or "v5e" in kind or "v5lite" in kind:
            return 128
    except Exception:
        pass
    return 256


def _vmem_capacity_bytes():
    try:
        return int(pltpu.get_tpu_info().vmem_capacity_bytes)
    except Exception:
        return 64 << 20          # conservative fallback (v7x per-core VMEM)


def _leaky_relu(x):
    return jnp.where(x > 0, x, _LRELU_SLOPE * x)


# ---------------------------------------------------------------------------
# Fused kernel: GCN conv stack + GlobalMeanPool + readout MLP + output Linear
# grid = (n_conv_layers, n_row_tiles); both axes sequential (scratch-carried).
# ---------------------------------------------------------------------------
def _fused_forward_kernel(pmat_ref, x_hbm, adj_hbm, w_ref, b_ref,
                          rw_ref, rb_ref, ow_ref, ob_ref,
                          out_ref, adj_vmem, h_buf, xw_buf, sem,
                          *, tm, n_readout):
    l = pl.program_id(0)                 # conv layer    (outer, sequential)
    i = pl.program_id(1)                 # node-row tile (inner, sequential)
    n_layers = pl.num_programs(0)
    n_tiles = pl.num_programs(1)

    @pl.when(jnp.logical_and(l == 0, i == 0))
    def _init():
        # Single-buffered residents: adjacency -> VMEM scratch; bf16 node
        # features go straight into the resident feature buffer.
        cp_adj = pltpu.make_async_copy(adj_hbm, adj_vmem, sem.at[0])
        cp_x = pltpu.make_async_copy(x_hbm, h_buf, sem.at[1])
        cp_adj.start()
        cp_x.start()
        cp_x.wait()
        cp_adj.wait()

    @pl.when(i == 0)
    def _project():
        # Per-layer projection H @ W'_l (BatchNorm already folded into W'/b'),
        # computed once per layer and reused by every row tile
        # (project-then-aggregate associativity).
        # TODO(synk): fold this into the previous layer's tile epilogue
        # (h_rows @ W_{l+1}) to remove the i==0 pipeline bubble.
        xw_buf[...] = jnp.dot(h_buf[...], w_ref[0],
                              preferred_element_type=jnp.float32
                              ).astype(jnp.bfloat16)

    # Aggregate one tile of node rows: A_hat[row0:row0+tm, :] @ (H W'_l).
    row0 = pl.multiple_of(i * tm, tm)
    a_rows = adj_vmem[pl.ds(row0, tm), :]
    h_rows = jnp.dot(a_rows, xw_buf[...],
                     preferred_element_type=jnp.float32) + b_ref[0]
    h_rows = _leaky_relu(h_rows)          # eval-mode dropout = identity
    h_buf[pl.ds(row0, tm), :] = h_rows.astype(jnp.bfloat16)

    @pl.when(jnp.logical_and(l == n_layers - 1, i == n_tiles - 1))
    def _tail():
        # GlobalMeanPool as [G, N] @ [N, D] (pmat rows hold 1/count_g),
        # then readout MLP + output Linear.  Everything stays in VMEM; the
        # only HBM output of the whole kernel is the [g_pad, c_pad] result.
        g = jnp.dot(pmat_ref[...], h_buf[...],
                    preferred_element_type=jnp.float32)
        for r in range(n_readout):        # Linear + LeakyReLU (eval dropout=id)
            g = jnp.dot(g.astype(jnp.bfloat16), rw_ref[r],
                        preferred_element_type=jnp.float32) + rb_ref[r]
            g = _leaky_relu(g)
        out_ref[...] = jnp.dot(g.astype(jnp.bfloat16), ow_ref[...],
                               preferred_element_type=jnp.float32) + ob_ref[...]


def fused_forward(x_bf16, adj_bf16, pmat_bf16, conv_w, conv_b,
                  ro_w, ro_b, out_w, out_b, *, tm):
    n_pad, d_pad = x_bf16.shape
    n_layers = conv_w.shape[0]
    n_readout = ro_w.shape[0]
    g_pad, _ = pmat_bf16.shape
    c_pad = out_w.shape[1]
    n_tiles = n_pad // tm

    # VMEM budget: single-buffered adjacency + two feature scratch buffers +
    # the small (default double-buffered) weight / pool / output blocks.
    need = (n_pad * n_pad * 2                         # adjacency (single copy)
            + 2 * n_pad * d_pad * 2                   # h_buf + xw_buf (bf16)
            + 2 * g_pad * n_pad * 2                   # pmat (double-buffered)
            + 2 * (d_pad * d_pad * 2 + d_pad * 4)     # conv W_l / b_l blocks
            + 2 * n_readout * (d_pad * d_pad * 2 + d_pad * 4)
            + 2 * (d_pad * c_pad * 2 + c_pad * 4)     # output-layer weights
            + 2 * g_pad * c_pad * 4                   # output block
            + (4 << 20))                              # Mosaic internal scratch
    cap = _vmem_capacity_bytes()
    vmem_limit = int(min(max(need, 16 << 20), max(cap - (16 << 20), 32 << 20)))
    # TODO(synk): for graphs whose bf16 adjacency no longer fits in VMEM,
    # stream adjacency column panels via a third (K) grid axis (f32 accumulate,
    # finalize at k==last) instead of keeping it resident; on v7x also shard
    # row tiles across the 2 TensorCores.

    return pl.pallas_call(
        functools.partial(_fused_forward_kernel, tm=tm, n_readout=n_readout),
        out_shape=jax.ShapeDtypeStruct((g_pad, c_pad), jnp.float32),
        grid_spec=pltpu.PrefetchScalarGridSpec(
            num_scalar_prefetch=0,
            grid=(n_layers, n_tiles),
            in_specs=[
                pl.BlockSpec((g_pad, n_pad), lambda l, i: (0, 0)),            # pmat (bf16)
                pl.BlockSpec(memory_space=pl.ANY),                            # x (bf16, HBM)
                pl.BlockSpec(memory_space=pl.ANY),                            # adj (bf16, HBM)
                pl.BlockSpec((1, d_pad, d_pad), lambda l, i: (l, 0, 0)),      # W'_l (bf16)
                pl.BlockSpec((1, 1, d_pad), lambda l, i: (l, 0, 0)),          # b'_l (f32)
                pl.BlockSpec((n_readout, d_pad, d_pad), lambda l, i: (0, 0, 0)),  # readout W
                pl.BlockSpec((n_readout, 1, d_pad), lambda l, i: (0, 0, 0)),      # readout b
                pl.BlockSpec((d_pad, c_pad), lambda l, i: (0, 0)),            # out W (bf16)
                pl.BlockSpec((1, c_pad), lambda l, i: (0, 0)),                # out b (f32)
            ],
            out_specs=pl.BlockSpec((g_pad, c_pad), lambda l, i: (0, 0)),
            scratch_shapes=[
                pltpu.VMEM((n_pad, n_pad), jnp.bfloat16),   # adjacency, 1 copy
                pltpu.VMEM((n_pad, d_pad), jnp.bfloat16),   # resident node features
                pltpu.VMEM((n_pad, d_pad), jnp.bfloat16),   # per-layer H @ W'
                pltpu.SemaphoreType.DMA((2,)),
            ]),
        compiler_params=pltpu.CompilerParams(
            # Both axes carry VMEM-scratch dependencies (layer chaining, the
            # shared per-layer projection, the pooled tail) -> sequential.
            dimension_semantics=("arbitrary", "arbitrary"),
            vmem_limit_bytes=vmem_limit),
    )(pmat_bf16, x_bf16, adj_bf16, conv_w, conv_b, ro_w, ro_b, out_w, out_b)


# ---------------------------------------------------------------------------
# Model: parameters + forward (mirrors BaseNetwork.forward, eval mode)
# ---------------------------------------------------------------------------
class BaseNetworkPallas:
    def __init__(self, n_node_features, embedding_dim=32, n_convolutions=2,
                 readout_layers=2, n_classes=1, seed=42):
        self.n_node_features = n_node_features
        self.embedding_dim = embedding_dim
        self.n_convolutions = n_convolutions
        self.readout_layers = readout_layers
        self.n_classes = n_classes
        self.graph_embedding = embedding_dim          # GlobalMeanPool (default)
        self.d_pad = _round_up(max(n_node_features, embedding_dim), _LANE)
        self.c_pad = _round_up(n_classes, _LANE)
        self._tm = _default_row_tile()

        key = jax.random.PRNGKey(seed)

        # Raw (PyTorch-layout) parameters, also used by the f32 reference path.
        self.conv_params_raw = []
        f_in = n_node_features
        for _ in range(n_convolutions):
            key, kw, kb, kg, kbt, km, kv = jax.random.split(key, 7)
            w = jax.random.normal(kw, (f_in, embedding_dim), jnp.float32) * 0.1
            b = jax.random.normal(kb, (1, embedding_dim), jnp.float32) * 0.01
            gamma = 1.0 + 0.05 * jax.random.normal(kg, (1, embedding_dim), jnp.float32)
            beta = 0.05 * jax.random.normal(kbt, (1, embedding_dim), jnp.float32)
            rmean = 0.05 * jax.random.normal(km, (1, embedding_dim), jnp.float32)
            rvar = 1.0 + 0.05 * jnp.abs(jax.random.normal(kv, (1, embedding_dim), jnp.float32))
            self.conv_params_raw.append((w, b, gamma, beta, rmean, rvar))
            f_in = embedding_dim

        self.readout_params_raw = []
        f_in = self.graph_embedding
        for _ in range(readout_layers):
            key, kw, kb = jax.random.split(key, 3)
            w = jax.random.normal(kw, (f_in, embedding_dim), jnp.float32) * 0.1
            b = jax.random.normal(kb, (1, embedding_dim), jnp.float32) * 0.01
            self.readout_params_raw.append((w, b))
            f_in = embedding_dim

        key, kw, kb = jax.random.split(key, 3)
        self.out_w_raw = jax.random.normal(kw, (embedding_dim, n_classes), jnp.float32) * 0.1
        self.out_b_raw = jax.random.normal(kb, (1, n_classes), jnp.float32) * 0.01

        # Kernel-side parameters: fold BatchNorm (eval) into W/b, zero-pad to
        # lane-dense shapes, and stack per layer.
        # NOTE: the folded BN scale is quantized to bf16 with the weights; for
        # deep stacks / tiny running variance keep W in f32 instead.
        d = self.d_pad
        conv_w, conv_b = [], []
        for (w, b, gamma, beta, rmean, rvar) in self.conv_params_raw:
            s = gamma * jax.lax.rsqrt(rvar + _BN_EPS)            # [1, E]
            wf, bf = w * s, (b - rmean) * s + beta
            conv_w.append(jnp.zeros((d, d), jnp.float32)
                          .at[:wf.shape[0], :wf.shape[1]].set(wf))
            conv_b.append(jnp.zeros((1, d), jnp.float32).at[:, :bf.shape[1]].set(bf))
        self.conv_w = jnp.stack(conv_w).astype(jnp.bfloat16)     # [L, d, d]
        self.conv_b = jnp.stack(conv_b)                          # [L, 1, d] f32

        ro_w, ro_b = [], []
        for (w, b) in self.readout_params_raw:
            ro_w.append(jnp.zeros((d, d), jnp.float32).at[:w.shape[0], :w.shape[1]].set(w))
            ro_b.append(jnp.zeros((1, d), jnp.float32).at[:, :b.shape[1]].set(b))
        self.ro_w = jnp.stack(ro_w).astype(jnp.bfloat16)         # [R, d, d]
        self.ro_b = jnp.stack(ro_b)                              # [R, 1, d] f32

        self.out_w = (jnp.zeros((d, self.c_pad), jnp.float32)
                      .at[:embedding_dim, :n_classes].set(self.out_w_raw)
                      ).astype(jnp.bfloat16)
        self.out_b = jnp.zeros((1, self.c_pad), jnp.float32).at[:, :n_classes].set(self.out_b_raw)

        self._fwd = jax.jit(self._forward_impl, static_argnames=("num_graphs",))

    # --- glue + kernel -------------------------------------------------------
    def _forward_impl(self, x, edge_index, batch_index, *, num_graphs):
        n = x.shape[0]
        tm = self._tm
        n_pad = _round_up(max(n, tm), tm)
        d = self.d_pad

        # Node features, padded and cast to bf16 (they only seed the bf16
        # resident feature buffer inside the kernel).
        x_pad = jnp.zeros((n_pad, d), jnp.bfloat16).at[:n, :x.shape[1]].set(
            x.astype(jnp.bfloat16))

        # Normalized adjacency A_hat = D^-1/2 (A + I) D^-1/2 with unit
        # self-loops (diagonal forced to exactly 1); padded rows/cols stay
        # zero.  The dinv row/col scaling is fused into the bf16 cast.
        a = jnp.zeros((n_pad, n_pad), jnp.float32)
        a = a.at[edge_index[0], edge_index[1]].set(1.0)
        a = jnp.maximum(a, a.T)                                  # undirected
        real = jnp.arange(n_pad) < n
        diag = jnp.eye(n_pad, dtype=bool) & real[:, None]
        a = jnp.where(diag, 1.0, a)
        deg = jnp.sum(a, axis=1)
        dinv = jnp.where(deg > 0, jax.lax.rsqrt(jnp.maximum(deg, 1e-12)), 0.0)
        adj = (dinv[:, None] * (a * dinv[None, :])).astype(jnp.bfloat16)
        # TODO(synk): for very large N build the adjacency sparsely / in panels
        # to avoid multiple dense N^2 f32 temporaries in the XLA glue.

        # Mean-pool matrix [g_pad, n_pad] (bf16); padded graphs/nodes get 0.
        g_pad = _round_up(max(num_graphs, 8), 8)
        onehot = (batch_index[None, :] == jnp.arange(g_pad)[:, None]).astype(jnp.float32)
        counts = jnp.maximum(jnp.sum(onehot, axis=1, keepdims=True), 1.0)
        pmat = (jnp.zeros((g_pad, n_pad), jnp.float32)
                .at[:, :n].set(onehot / counts)).astype(jnp.bfloat16)

        out = fused_forward(x_pad, adj, pmat, self.conv_w, self.conv_b,
                            self.ro_w, self.ro_b, self.out_w, self.out_b, tm=tm)
        preds = out[:num_graphs, :self.n_classes]
        if self.n_classes == 1:
            preds = preds.astype(jnp.float32)    # mirrors .float() in torch
        return preds

    def forward(self, x, edge_index, batch_index, num_graphs,
                edge_attr=None, monomer_weight=None):
        # TODO(synk): cross_att branch and monomer_weight weighting are ragged /
        # data-dependent and not exercised (cross_att=False, monomer_weight=None);
        # edge_attr is unused by the base GCN conv.
        del edge_attr, monomer_weight
        return self._fwd(x, edge_index, batch_index, num_graphs=num_graphs)

    # --- pure-JAX f32 reference (unfolded BN, unpadded) for validation -------
    def reference_forward(self, x, edge_index, batch_index, num_graphs):
        n = x.shape[0]
        a = jnp.zeros((n, n), jnp.float32).at[edge_index[0], edge_index[1]].set(1.0)
        a = jnp.maximum(a, a.T)
        a = jnp.where(jnp.eye(n, dtype=bool), 1.0, a)
        deg = jnp.sum(a, axis=1)
        dinv = jax.lax.rsqrt(jnp.maximum(deg, 1e-12))
        a_hat = dinv[:, None] * a * dinv[None, :]

        h = x.astype(jnp.float32)
        for (w, b, gamma, beta, rmean, rvar) in self.conv_params_raw:
            h = a_hat @ (h @ w) + b
            h = (h - rmean) * jax.lax.rsqrt(rvar + _BN_EPS) * gamma + beta
            h = jnp.where(h > 0, h, _LRELU_SLOPE * h)

        onehot = (batch_index[None, :] == jnp.arange(num_graphs)[:, None]).astype(jnp.float32)
        counts = jnp.maximum(jnp.sum(onehot, axis=1, keepdims=True), 1.0)
        g = (onehot / counts) @ h
        for (w, b) in self.readout_params_raw:
            g = g @ w + b
            g = jnp.where(g > 0, g, _LRELU_SLOPE * g)
        return g @ self.out_w_raw + self.out_b_raw


# ---------------------------------------------------------------------------
if __name__ == "__main__":
    key = jax.random.PRNGKey(0)
    num_nodes = 200              # pads to the row tile (256)
    n_node_features = 16
    num_graphs = 2

    kx, ke = jax.random.split(key)
    x = jax.random.normal(kx, (num_nodes, n_node_features), jnp.float32)
    edge_index = jax.random.randint(ke, (2, 400), 0, num_nodes, dtype=jnp.int32)
    batch_index = jnp.concatenate([
        jnp.zeros((num_nodes // 2,), jnp.int32),
        jnp.ones((num_nodes - num_nodes // 2,), jnp.int32),
    ])

    model = BaseNetworkPallas(
        n_node_features=n_node_features,
        embedding_dim=32,
        n_convolutions=2,
        readout_layers=2,
        n_classes=1,
        seed=42,
    )

    preds = jax.block_until_ready(model.forward(x, edge_index, batch_index, num_graphs))
    assert preds.shape == (num_graphs, 1)
    assert preds.dtype == jnp.float32

    ref = jax.block_until_ready(
        model.reference_forward(x, edge_index, batch_index, num_graphs))
    err = float(jnp.max(jnp.abs(preds - ref)))
    assert err < 5e-2, f"kernel/reference mismatch: max abs err {err}"
    print("KERNEL_OK")
</pallas_src>

<mosaic_0001>
module attributes {stable_mosaic.version = 11 : i64} {
  func.func @_fused_forward_kernel(%arg0: i32, %arg1: i32, %arg2: memref<8x256xbf16, #tpu.memory_space<vmem>>, %arg3: memref<256x128xbf16, #tpu.memory_space<any>>, %arg4: memref<256x256xbf16, #tpu.memory_space<any>>, %arg5: memref<1x128x128xbf16, #tpu.memory_space<vmem>>, %arg6: memref<1x1x128xf32, #tpu.memory_space<vmem>>, %arg7: memref<2x128x128xbf16, #tpu.memory_space<vmem>>, %arg8: memref<2x1x128xf32, #tpu.memory_space<vmem>>, %arg9: memref<128x128xbf16, #tpu.memory_space<vmem>>, %arg10: memref<1x128xf32, #tpu.memory_space<vmem>>, %arg11: memref<8x128xf32, #tpu.memory_space<vmem>>, %arg12: memref<256x256xbf16, #tpu.memory_space<vmem>>, %arg13: memref<256x128xbf16, #tpu.memory_space<vmem>>, %arg14: memref<256x128xbf16, #tpu.memory_space<vmem>>, %arg15: memref<2x!tpu.dma_semaphore, #tpu.memory_space<semaphore_mem>>) attributes {dimension_semantics = [#tpu.dimension_semantics<arbitrary>, #tpu.dimension_semantics<arbitrary>], iteration_bounds = array<i64: 2, 1>, scalar_prefetch = 0 : i64, scratch_operands = 4 : i64, tpu.core_type = #tpu.core_type<tc>, window_params = [{pipeline_mode = #tpu.pipeline_mode<synchronous>, transform_indices = @transform_0, window_bounds = array<i64: 8, 256>}, {}, {}, {transform_indices = @transform_3, window_bounds = array<i64: 1, 128, 128>}, {transform_indices = @transform_4, window_bounds = array<i64: 1, 1, 128>}, {pipeline_mode = #tpu.pipeline_mode<synchronous>, transform_indices = @transform_5, window_bounds = array<i64: 2, 128, 128>}, {pipeline_mode = #tpu.pipeline_mode<synchronous>, transform_indices = @transform_6, window_bounds = array<i64: 2, 1, 128>}, {pipeline_mode = #tpu.pipeline_mode<synchronous>, transform_indices = @transform_7, window_bounds = array<i64: 128, 128>}, {pipeline_mode = #tpu.pipeline_mode<synchronous>, transform_indices = @transform_8, window_bounds = array<i64: 1, 128>}, {pipeline_mode = #tpu.pipeline_mode<synchronous>, transform_indices = @transform_9, window_bounds = array<i64: 8, 128>}]} {
    %c0_i32 = arith.constant 0 : i32
    %0 = arith.cmpi eq, %arg0, %c0_i32 : i32
    %c0_i32_0 = arith.constant 0 : i32
    %1 = arith.cmpi eq, %arg1, %c0_i32_0 : i32
    %2 = arith.andi %0, %1 : i1
    %3 = arith.extui %2 : i1 to i32
    %c0_i32_1 = arith.constant 0 : i32
    %4 = arith.cmpi ne, %3, %c0_i32_1 : i32
    scf.if %4 {
      %c0_i32_14 = arith.constant 0 : i32
      %31 = tpu.memref_slice %arg15[%c0_i32_14] : memref<2x!tpu.dma_semaphore, #tpu.memory_space<semaphore_mem>> -> memref<1x!tpu.dma_semaphore, #tpu.memory_space<semaphore_mem>>
      %32 = tpu.memref_squeeze %31 : memref<1x!tpu.dma_semaphore, #tpu.memory_space<semaphore_mem>> -> memref<!tpu.dma_semaphore, #tpu.memory_space<semaphore_mem>>
      tpu.enqueue_dma source(%arg4 : memref<256x256xbf16, #tpu.memory_space<any>>) target(%arg12 : memref<256x256xbf16, #tpu.memory_space<vmem>>) target_semaphore(%32 : memref<!tpu.dma_semaphore, #tpu.memory_space<semaphore_mem>>)
      %c1_i32_15 = arith.constant 1 : i32
      %33 = tpu.memref_slice %arg15[%c1_i32_15] : memref<2x!tpu.dma_semaphore, #tpu.memory_space<semaphore_mem>> -> memref<1x!tpu.dma_semaphore, #tpu.memory_space<semaphore_mem>>
      %34 = tpu.memref_squeeze %33 : memref<1x!tpu.dma_semaphore, #tpu.memory_space<semaphore_mem>> -> memref<!tpu.dma_semaphore, #tpu.memory_space<semaphore_mem>>
      tpu.enqueue_dma source(%arg3 : memref<256x128xbf16, #tpu.memory_space<any>>) target(%arg13 : memref<256x128xbf16, #tpu.memory_space<vmem>>) target_semaphore(%34 : memref<!tpu.dma_semaphore, #tpu.memory_space<semaphore_mem>>)
      %c1_i32_16 = arith.constant 1 : i32
      %35 = tpu.memref_slice %arg15[%c1_i32_16] : memref<2x!tpu.dma_semaphore, #tpu.memory_space<semaphore_mem>> -> memref<1x!tpu.dma_semaphore, #tpu.memory_space<semaphore_mem>>
      %36 = tpu.memref_squeeze %35 : memref<1x!tpu.dma_semaphore, #tpu.memory_space<semaphore_mem>> -> memref<!tpu.dma_semaphore, #tpu.memory_space<semaphore_mem>>
      tpu.wait_dma2 semaphore(%36 : memref<!tpu.dma_semaphore, #tpu.memory_space<semaphore_mem>>) src(%arg3 : memref<256x128xbf16, #tpu.memory_space<any>>) dst(%arg13 : memref<256x128xbf16, #tpu.memory_space<vmem>>)
      %c0_i32_17 = arith.constant 0 : i32
      %37 = tpu.memref_slice %arg15[%c0_i32_17] : memref<2x!tpu.dma_semaphore, #tpu.memory_space<semaphore_mem>> -> memref<1x!tpu.dma_semaphore, #tpu.memory_space<semaphore_mem>>
      %38 = tpu.memref_squeeze %37 : memref<1x!tpu.dma_semaphore, #tpu.memory_space<semaphore_mem>> -> memref<!tpu.dma_semaphore, #tpu.memory_space<semaphore_mem>>
      tpu.wait_dma2 semaphore(%38 : memref<!tpu.dma_semaphore, #tpu.memory_space<semaphore_mem>>) src(%arg4 : memref<256x256xbf16, #tpu.memory_space<any>>) dst(%arg12 : memref<256x256xbf16, #tpu.memory_space<vmem>>)
    } else {
    }
    %c0_i32_2 = arith.constant 0 : i32
    %5 = arith.cmpi eq, %arg1, %c0_i32_2 : i32
    %6 = arith.extui %5 : i1 to i32
    %c0_i32_3 = arith.constant 0 : i32
    %7 = arith.cmpi ne, %6, %c0_i32_3 : i32
    scf.if %7 {
      %c0_14 = arith.constant 0 : index
      %c0_15 = arith.constant 0 : index
      %31 = vector.load %arg13[%c0_14, %c0_15] : memref<256x128xbf16, #tpu.memory_space<vmem>>, vector<256x128xbf16>
      %c0_16 = arith.constant 0 : index
      %c0_17 = arith.constant 0 : index
      %c0_18 = arith.constant 0 : index
      %32 = vector.load %arg5[%c0_16, %c0_17, %c0_18] : memref<1x128x128xbf16, #tpu.memory_space<vmem>>, vector<1x128x128xbf16>
      %33 = vector.shape_cast %32 : vector<1x128x128xbf16> to vector<128x128xbf16>
      %cst_19 = arith.constant dense<0.000000e+00> : vector<256x128xf32>
      %34 = tpu.matmul %31, %33, %cst_19 {dimension_numbers = #tpu.dot_dimension_numbers<[1], [0], [0], [1], [0, 0, 1, 1], [], []>} : vector<256x128xbf16>, vector<128x128xbf16>, vector<256x128xf32> -> vector<256x128xf32>
      %35 = arith.truncf %34 : vector<256x128xf32> to vector<256x128xbf16>
      %c0_20 = arith.constant 0 : index
      %c0_21 = arith.constant 0 : index
      %36 = vector.load %arg14[%c0_20, %c0_21] : memref<256x128xbf16, #tpu.memory_space<vmem>>, vector<256x128xbf16>
      tpu.vector_store %arg14[%c0_20, %c0_21], %35 {strides = array<i32>} : memref<256x128xbf16, #tpu.memory_space<vmem>>, vector<256x128xbf16>,
    } else {
    }
    %c256_i32 = arith.constant 256 : i32
    %8 = arith.muli %arg1, %c256_i32 : i32
    %9 = tpu.assume_multiple %8, 256 : i32
    %10 = arith.index_cast %9 : i32 to index
    %c0 = arith.constant 0 : index
    %11 = vector.load %arg12[%10, %c0] : memref<256x256xbf16, #tpu.memory_space<vmem>>, vector<256x256xbf16>
    %c0_4 = arith.constant 0 : index
    %c0_5 = arith.constant 0 : index
    %12 = vector.load %arg14[%c0_4, %c0_5] : memref<256x128xbf16, #tpu.memory_space<vmem>>, vector<256x128xbf16>
    %cst = arith.constant dense<0.000000e+00> : vector<256x128xf32>
    %13 = tpu.matmul %11, %12, %cst {dimension_numbers = #tpu.dot_dimension_numbers<[1], [0], [0], [1], [0, 0, 1, 1], [], []>} : vector<256x256xbf16>, vector<256x128xbf16>, vector<256x128xf32> -> vector<256x128xf32>
    %c0_6 = arith.constant 0 : index
    %c0_7 = arith.constant 0 : index
    %c0_8 = arith.constant 0 : index
    %14 = vector.load %arg6[%c0_6, %c0_7, %c0_8] : memref<1x1x128xf32, #tpu.memory_space<vmem>>, vector<1x1x128xf32>
    %15 = vector.shape_cast %14 : vector<1x1x128xf32> to vector<1x128xf32>
    %16 = vector.broadcast %15 : vector<1x128xf32> to vector<256x128xf32>
    %17 = arith.addf %13, %16 : vector<256x128xf32>
    %cst_9 = arith.constant 0.000000e+00 : f32
    %18 = vector.broadcast %cst_9 : f32 to vector<256x128xf32>
    %19 = arith.cmpf ogt, %17, %18 : vector<256x128xf32>
    %cst_10 = arith.constant 0.00999999977 : f32
    %20 = vector.broadcast %cst_10 : f32 to vector<256x128xf32>
    %21 = arith.mulf %20, %17 : vector<256x128xf32>
    %22 = arith.select %19, %17, %21 : vector<256x128xi1>, vector<256x128xf32>
    %23 = arith.truncf %22 : vector<256x128xf32> to vector<256x128xbf16>
    %24 = arith.index_cast %9 : i32 to index
    %c0_11 = arith.constant 0 : index
    %25 = vector.load %arg13[%24, %c0_11] : memref<256x128xbf16, #tpu.memory_space<vmem>>, vector<256x128xbf16>
    tpu.vector_store %arg13[%24, %c0_11], %23 {strides = array<i32>} : memref<256x128xbf16, #tpu.memory_space<vmem>>, vector<256x128xbf16>,
    %c1_i32 = arith.constant 1 : i32
    %26 = arith.cmpi eq, %arg0, %c1_i32 : i32
    %c0_i32_12 = arith.constant 0 : i32
    %27 = arith.cmpi eq, %arg1, %c0_i32_12 : i32
    %28 = arith.andi %26, %27 : i1
    %29 = arith.extui %28 : i1 to i32
    %c0_i32_13 = arith.constant 0 : i32
    %30 = arith.cmpi ne, %29, %c0_i32_13 : i32
    scf.if %30 {
      %c0_14 = arith.constant 0 : index
      %c0_15 = arith.constant 0 : index
      %31 = vector.load %arg2[%c0_14, %c0_15] : memref<8x256xbf16, #tpu.memory_space<vmem>>, vector<8x256xbf16>
      %c0_16 = arith.constant 0 : index
      %c0_17 = arith.constant 0 : index
      %32 = vector.load %arg13[%c0_16, %c0_17] : memref<256x128xbf16, #tpu.memory_space<vmem>>, vector<256x128xbf16>
      %cst_18 = arith.constant dense<0.000000e+00> : vector<8x128xf32>
      %33 = tpu.matmul %31, %32, %cst_18 {dimension_numbers = #tpu.dot_dimension_numbers<[1], [0], [0], [1], [0, 0, 1, 1], [], []>} : vector<8x256xbf16>, vector<256x128xbf16>, vector<8x128xf32> -> vector<8x128xf32>
      %34 = arith.truncf %33 : vector<8x128xf32> to vector<8x128xbf16>
      %c0_19 = arith.constant 0 : index
      %c0_20 = arith.constant 0 : index
      %c0_21 = arith.constant 0 : index
      %35 = vector.load %arg7[%c0_19, %c0_20, %c0_21] : memref<2x128x128xbf16, #tpu.memory_space<vmem>>, vector<1x128x128xbf16>
      %36 = vector.shape_cast %35 : vector<1x128x128xbf16> to vector<128x128xbf16>
      %cst_22 = arith.constant dense<0.000000e+00> : vector<8x128xf32>
      %37 = tpu.matmul %34, %36, %cst_22 {dimension_numbers = #tpu.dot_dimension_numbers<[1], [0], [0], [1], [0, 0, 1, 1], [], []>} : vector<8x128xbf16>, vector<128x128xbf16>, vector<8x128xf32> -> vector<8x128xf32>
      %c0_23 = arith.constant 0 : index
      %c0_24 = arith.constant 0 : index
      %c0_25 = arith.constant 0 : index
      %38 = vector.load %arg8[%c0_23, %c0_24, %c0_25] : memref<2x1x128xf32, #tpu.memory_space<vmem>>, vector<1x1x128xf32>
      %39 = vector.shape_cast %38 : vector<1x1x128xf32> to vector<1x128xf32>
      %40 = vector.broadcast %39 : vector<1x128xf32> to vector<8x128xf32>
      %41 = arith.addf %37, %40 : vector<8x128xf32>
      %cst_26 = arith.constant 0.000000e+00 : f32
      %42 = vector.broadcast %cst_26 : f32 to vector<8x128xf32>
      %43 = arith.cmpf ogt, %41, %42 : vector<8x128xf32>
      %cst_27 = arith.constant 0.00999999977 : f32
      %44 = vector.broadcast %cst_27 : f32 to vector<8x128xf32>
      %45 = arith.mulf %44, %41 : vector<8x128xf32>
      %46 = arith.select %43, %41, %45 : vector<8x128xi1>, vector<8x128xf32>
      %47 = arith.truncf %46 : vector<8x128xf32> to vector<8x128xbf16>
      %c1 = arith.constant 1 : index
      %c0_28 = arith.constant 0 : index
      %c0_29 = arith.constant 0 : index
      %48 = vector.load %arg7[%c1, %c0_28, %c0_29] : memref<2x128x128xbf16, #tpu.memory_space<vmem>>, vector<1x128x128xbf16>
      %49 = vector.shape_cast %48 : vector<1x128x128xbf16> to vector<128x128xbf16>
      %cst_30 = arith.constant dense<0.000000e+00> : vector<8x128xf32>
      %50 = tpu.matmul %47, %49, %cst_30 {dimension_numbers = #tpu.dot_dimension_numbers<[1], [0], [0], [1], [0, 0, 1, 1], [], []>} : vector<8x128xbf16>, vector<128x128xbf16>, vector<8x128xf32> -> vector<8x128xf32>
      %c1_31 = arith.constant 1 : index
      %c0_32 = arith.constant 0 : index
      %c0_33 = arith.constant 0 : index
      %51 = vector.load %arg8[%c1_31, %c0_32, %c0_33] : memref<2x1x128xf32, #tpu.memory_space<vmem>>, vector<1x1x128xf32>
      %52 = vector.shape_cast %51 : vector<1x1x128xf32> to vector<1x128xf32>
      %53 = vector.broadcast %52 : vector<1x128xf32> to vector<8x128xf32>
      %54 = arith.addf %50, %53 : vector<8x128xf32>
      %cst_34 = arith.constant 0.000000e+00 : f32
      %55 = vector.broadcast %cst_34 : f32 to vector<8x128xf32>
      %56 = arith.cmpf ogt, %54, %55 : vector<8x128xf32>
      %cst_35 = arith.constant 0.00999999977 : f32
      %57 = vector.broadcast %cst_35 : f32 to vector<8x128xf32>
      %58 = arith.mulf %57, %54 : vector<8x128xf32>
      %59 = arith.select %56, %54, %58 : vector<8x128xi1>, vector<8x128xf32>
      %60 = arith.truncf %59 : vector<8x128xf32> to vector<8x128xbf16>
      %c0_36 = arith.constant 0 : index
      %c0_37 = arith.constant 0 : index
      %61 = vector.load %arg9[%c0_36, %c0_37] : memref<128x128xbf16, #tpu.memory_space<vmem>>, vector<128x128xbf16>
      %cst_38 = arith.constant dense<0.000000e+00> : vector<8x128xf32>
      %62 = tpu.matmul %60, %61, %cst_38 {dimension_numbers = #tpu.dot_dimension_numbers<[1], [0], [0], [1], [0, 0, 1, 1], [], []>} : vector<8x128xbf16>, vector<128x128xbf16>, vector<8x128xf32> -> vector<8x128xf32>
      %c0_39 = arith.constant 0 : index
      %c0_40 = arith.constant 0 : index
      %63 = vector.load %arg10[%c0_39, %c0_40] : memref<1x128xf32, #tpu.memory_space<vmem>>, vector<1x128xf32>
      %64 = vector.broadcast %63 : vector<1x128xf32> to vector<8x128xf32>
      %65 = arith.addf %62, %64 : vector<8x128xf32>
      %c0_41 = arith.constant 0 : index
      %c0_42 = arith.constant 0 : index
      %66 = vector.load %arg11[%c0_41, %c0_42] : memref<8x128xf32, #tpu.memory_space<vmem>>, vector<8x128xf32>
      tpu.vector_store %arg11[%c0_41, %c0_42], %65 {strides = array<i32>} : memref<8x128xf32, #tpu.memory_space<vmem>>, vector<8x128xf32>,
    } else {
    }
    return
  }
  func.func @transform_0(%arg0: i32, %arg1: i32) -> (i32, i32) {
    %c0_i32 = arith.constant 0 : i32
    %c0_i32_0 = arith.constant 0 : i32
    %c0_i32_1 = arith.constant 0 : i32
    return %c0_i32, %c0_i32_0 : i32, i32
  }
  func.func @transform_3(%arg0: i32, %arg1: i32) -> (i32, i32, i32) {
    %c0_i32 = arith.constant 0 : i32
    %c0_i32_0 = arith.constant 0 : i32
    %c0_i32_1 = arith.constant 0 : i32
    return %arg0, %c0_i32, %c0_i32_0 : i32, i32, i32
  }
  func.func @transform_4(%arg0: i32, %arg1: i32) -> (i32, i32, i32) {
    %c0_i32 = arith.constant 0 : i32
    %c0_i32_0 = arith.constant 0 : i32
    %c0_i32_1 = arith.constant 0 : i32
    return %arg0, %c0_i32, %c0_i32_0 : i32, i32, i32
  }
  func.func @transform_5(%arg0: i32, %arg1: i32) -> (i32, i32, i32) {
    %c0_i32 = arith.constant 0 : i32
    %c0_i32_0 = arith.constant 0 : i32
    %c0_i32_1 = arith.constant 0 : i32
    %c0_i32_2 = arith.constant 0 : i32
    return %c0_i32, %c0_i32_0, %c0_i32_1 : i32, i32, i32
  }
  func.func @transform_6(%arg0: i32, %arg1: i32) -> (i32, i32, i32) {
    %c0_i32 = arith.constant 0 : i32
    %c0_i32_0 = arith.constant 0 : i32
    %c0_i32_1 = arith.constant 0 : i32
    %c0_i32_2 = arith.constant 0 : i32
    return %c0_i32, %c0_i32_0, %c0_i32_1 : i32, i32, i32
  }
  func.func @transform_7(%arg0: i32, %arg1: i32) -> (i32, i32) {
    %c0_i32 = arith.constant 0 : i32
    %c0_i32_0 = arith.constant 0 : i32
    %c0_i32_1 = arith.constant 0 : i32
    return %c0_i32, %c0_i32_0 : i32, i32
  }
  func.func @transform_8(%arg0: i32, %arg1: i32) -> (i32, i32) {
    %c0_i32 = arith.constant 0 : i32
    %c0_i32_0 = arith.constant 0 : i32
    %c0_i32_1 = arith.constant 0 : i32
    return %c0_i32, %c0_i32_0 : i32, i32
  }
  func.func @transform_9(%arg0: i32, %arg1: i32) -> (i32, i32) {
    %c0_i32 = arith.constant 0 : i32
    %c0_i32_0 = arith.constant 0 : i32
    %c0_i32_1 = arith.constant 0 : i32
    return %c0_i32, %c0_i32_0 : i32, i32
  }
}

</mosaic_0001>

<llo_original>
// kernel: _forward_impl.1
$region0: #{_forward_impl.1}
  #allocation0 [shape = 'u32[]', space=smem, size = 0x4, offset = 0x4, fixed_abs, tag = 'smem constant byte address 0x4 - core index']
  #allocation1 [shape = 'u32[72,128]{1,0:T(1,128)}', space=vmem, size = 0x9000, scoped, tag = 'internal scratch']
  #allocation2 [shape = 'bf16[256,256]{1,0:T(8,128)(2,1)}', space=vmem, size = 0x20000, scoped, tag = 'scratch operand']
  #allocation3 [shape = 'bf16[256,128]{1,0:T(8,128)(2,1)}', space=vmem, size = 0x10000, scoped, tag = 'scratch operand']
  #allocation4 [shape = 'bf16[256,128]{1,0:T(8,128)(2,1)}', space=vmem, size = 0x10000, scoped, tag = 'scratch operand']
  #allocation5 [shape = 's32[2]{0}', space=sflag, size = 0x8, scoped, tag = 'scratch operand']
  #allocation6 [shape = 's32[]', space=sflag, size = 0x4, offset = 0, fixed_abs, tag = 'sflag constant byte address 0x0 - dummy sync flag']
  #allocation7 [shape = 's32[]', space=sflag, size = 0x4, offset = 0, fixed_abs, tag = 'sflag constant byte address 0x0 - dummy sync flag']
  %s0 = inlined_call_operand.vmem [shape: bf16[8,256], index: 0, kind: input, shape index: {}]
  %s1 = inlined_call_operand.vmem [shape: bf16[256,128], index: 1, kind: input, shape index: {}]
  %s2 = inlined_call_operand.vmem [shape: bf16[256,256], index: 2, kind: input, shape index: {}]
  %s3 = inlined_call_operand.vmem [shape: bf16[2,128,128], index: 3, kind: input, shape index: {}]
  %s4 = inlined_call_operand.vmem [shape: f32[2,1,128], index: 4, kind: input, shape index: {}]
  %s5 = inlined_call_operand.vmem [shape: bf16[2,128,128], index: 5, kind: input, shape index: {}]
  %s6 = inlined_call_operand.vmem [shape: f32[2,1,128], index: 6, kind: input, shape index: {}]
  %s7 = inlined_call_operand.vmem [shape: bf16[128,128], index: 7, kind: input, shape index: {}]
  %s8 = inlined_call_operand.vmem [shape: f32[1,128], index: 8, kind: input, shape index: {}]
  %s9 = inlined_call_operand.vmem [shape: f32[8,128], index: 9, kind: output, shape index: {}]
  %s10 = sld [smem:[#allocation0]]
  $region111: #{_forward_impl.1} parent=0
    _
  %s12 = ssub.s32 1, %s10
  %s13 = scalar_select 0, %s12, %s10
  loop: start=0, step=1, limit=4
  $region2: #{_forward_impl.1} parent=0 // loop_pre_header
    _
  $region3: #{_forward_impl.1} parent=0 // loop_header
    %s15 = sphi 0, %s19
    %p16 = scmp.ge.s32.totalorder %s15, 4
    %s22 = sphi 0, %s34
    %s23 = sphi 0, %s30
    %s24 = sphi 0, %s22
    %s25 = sphi 0, %s23
    %s26 = sphi 0, %s24
    %s27 = sphi 0, %s25
    %s35 = sphi 0, %s35
    %s37 = sphi 0, %s35
    %s38 = sphi 0, %s37
    %s52 = sphi 0, %s38
    %s58 = sphi 0, %s60
    %s61 = sphi 0, %s58
    %s62 = sphi 0, %s61
    %s78 = sphi 0, %s62
    %s84 = sphi 0, %s86
    %s87 = sphi 0, %s84
    %s88 = sphi 0, %s87
    %s104 = sphi 0, %s88
    %s108 = sphi 0, %s108
    %s110 = sphi 0, %s108
    %s111 = sphi 0, %s110
    %s125 = sphi 0, %s111
    %s129 = sphi 0, %s129
    %s131 = sphi 0, %s129
    %s132 = sphi 0, %s131
    %s146 = sphi 0, %s132
    %s150 = sphi 0, %s150
    %s152 = sphi 0, %s150
    %s153 = sphi 0, %s152
    %s167 = sphi 0, %s153
    %s171 = sphi 0, %s171
    %s173 = sphi 0, %s171
    %s174 = sphi 0, %s173
    %s188 = sphi 0, %s174
    %s192 = sphi 0, %s192
    %s194 = sphi 0, %s192
    %s195 = sphi 0, %s194
    %s209 = sphi 0, %s195
  $region4: #{_forward_impl.1} parent=0 // loop_header_branch
    %18 = sbr.rel (%p16) target = $region8
  $region5: #{_forward_impl.1} parent=0 // loop_body
    %s20 = ssub.s32 %s15, 1
    %s21 = ssub.s32 %s15, 2
    %s28 = sadd.s32 1, %s23
    %p29 = scmp.ge.s32.totalorder %s28, 1
    %s30 = scalar_select %p29, 0, %s28
    %s31 = sadd.s32 1, %s22
    %s32 = scalar_select %p29, %s31, %s22
    %p33 = scmp.ge.s32.totalorder %s32, 2
    %s34 = scalar_select %p33, 0, %s32
    %s36 = sadd.s32 %s35, 1
    %p39 = scmp.eq.s32.totalorder %s15, 1
    %p40 = scmp.ne.s32.totalorder %s35, %s37
    %p41 = scmp.eq.s32.totalorder %s15, 0
    %p42 = por %p40, %p41
    %p43 = scmp.ne.s32.totalorder %s35, %s37
    %p44 = scmp.eq.s32.totalorder %s20, 1
    %p45 = por %p43, %p44
    %p46 = scmp.ne.s32.totalorder %s37, %s38
    %p47 = scmp.eq.s32.totalorder %s20, 0
    %p48 = por %p46, %p47
    %p49 = scmp.ne.s32.totalorder %s37, %s38
    %p50 = scmp.eq.s32.totalorder %s21, 1
    %p51 = por %p49, %p50
    %p53 = scmp.ne.s32.totalorder %s38, %s52
    %p54 = scmp.eq.s32.totalorder %s21, 0
    %p55 = por %p53, %p54
    %s56 = ssub.s32 %s22, %s34
    %p57 = scmp.eq.s32.totalorder %s56, 0
    %s59 = sadd.s32 %s58, 1
    %s60 = scalar_select %p57, %s58, %s59
    %p63 = pneg %p57
    %p64 = scmp.eq.s32.totalorder %s15, 1
    %p65 = por %p63, %p64
    %p66 = scmp.ne.s32.totalorder %s58, %s61
    %p67 = scmp.eq.s32.totalorder %s15, 0
    %p68 = por %p66, %p67
    %p69 = scmp.ne.s32.totalorder %s58, %s61
    %p70 = scmp.eq.s32.totalorder %s20, 1
    %p71 = por %p69, %p70
    %p72 = scmp.ne.s32.totalorder %s61, %s62
    %p73 = scmp.eq.s32.totalorder %s20, 0
    %p74 = por %p72, %p73
    %p75 = scmp.ne.s32.totalorder %s61, %s62
    %p76 = scmp.eq.s32.totalorder %s21, 1
    %p77 = por %p75, %p76
    %p79 = scmp.ne.s32.totalorder %s62, %s78
    %p80 = scmp.eq.s32.totalorder %s21, 0
    %p81 = por %p79, %p80
    %s82 = ssub.s32 %s22, %s34
    %p83 = scmp.eq.s32.totalorder %s82, 0
    %s85 = sadd.s32 %s84, 1
    %s86 = scalar_select %p83, %s84, %s85
    %p89 = pneg %p83
    %p90 = scmp.eq.s32.totalorder %s15, 1
    %p91 = por %p89, %p90
    %p92 = scmp.ne.s32.totalorder %s84, %s87
    %p93 = scmp.eq.s32.totalorder %s15, 0
    %p94 = por %p92, %p93
    %p95 = scmp.ne.s32.totalorder %s84, %s87
    %p96 = scmp.eq.s32.totalorder %s20, 1
    %p97 = por %p95, %p96
    %p98 = scmp.ne.s32.totalorder %s87, %s88
    %p99 = scmp.eq.s32.totalorder %s20, 0
    %p100 = por %p98, %p99
    %p101 = scmp.ne.s32.totalorder %s87, %s88
    %p102 = scmp.eq.s32.totalorder %s21, 1
    %p103 = por %p101, %p102
    %p105 = scmp.ne.s32.totalorder %s88, %s104
    %p106 = scmp.eq.s32.totalorder %s21, 0
    %p107 = por %p105, %p106
    %s109 = sadd.s32 %s108, 1
    %p112 = scmp.eq.s32.totalorder %s15, 1
    %p113 = scmp.ne.s32.totalorder %s108, %s110
    %p114 = scmp.eq.s32.totalorder %s15, 0
    %p115 = por %p113, %p114
    %p116 = scmp.ne.s32.totalorder %s108, %s110
    %p117 = scmp.eq.s32.totalorder %s20, 1
    %p118 = por %p116, %p117
    %p119 = scmp.ne.s32.totalorder %s110, %s111
    %p120 = scmp.eq.s32.totalorder %s20, 0
    %p121 = por %p119, %p120
    %p122 = scmp.ne.s32.totalorder %s110, %s111
    %p123 = scmp.eq.s32.totalorder %s21, 1
    %p124 = por %p122, %p123
    %p126 = scmp.ne.s32.totalorder %s111, %s125
    %p127 = scmp.eq.s32.totalorder %s21, 0
    %p128 = por %p126, %p127
    %s130 = sadd.s32 %s129, 1
    %p133 = scmp.eq.s32.totalorder %s15, 1
    %p134 = scmp.ne.s32.totalorder %s129, %s131
    %p135 = scmp.eq.s32.totalorder %s15, 0
    %p136 = por %p134, %p135
    %p137 = scmp.ne.s32.totalorder %s129, %s131
    %p138 = scmp.eq.s32.totalorder %s20, 1
    %p139 = por %p137, %p138
    %p140 = scmp.ne.s32.totalorder %s131, %s132
    %p141 = scmp.eq.s32.totalorder %s20, 0
    %p142 = por %p140, %p141
    %p143 = scmp.ne.s32.totalorder %s131, %s132
    %p144 = scmp.eq.s32.totalorder %s21, 1
    %p145 = por %p143, %p144
    %p147 = scmp.ne.s32.totalorder %s132, %s146
    %p148 = scmp.eq.s32.totalorder %s21, 0
    %p149 = por %p147, %p148
    %s151 = sadd.s32 %s150, 1
    %p154 = scmp.eq.s32.totalorder %s15, 1
    %p155 = scmp.ne.s32.totalorder %s150, %s152
    %p156 = scmp.eq.s32.totalorder %s15, 0
    %p157 = por %p155, %p156
    %p158 = scmp.ne.s32.totalorder %s150, %s152
    %p159 = scmp.eq.s32.totalorder %s20, 1
    %p160 = por %p158, %p159
    %p161 = scmp.ne.s32.totalorder %s152, %s153
    %p162 = scmp.eq.s32.totalorder %s20, 0
    %p163 = por %p161, %p162
    %p164 = scmp.ne.s32.totalorder %s152, %s153
    %p165 = scmp.eq.s32.totalorder %s21, 1
    %p166 = por %p164, %p165
    %p168 = scmp.ne.s32.totalorder %s153, %s167
    %p169 = scmp.eq.s32.totalorder %s21, 0
    %p170 = por %p168, %p169
    %s172 = sadd.s32 %s171, 1
    %p175 = scmp.eq.s32.totalorder %s15, 1
    %p176 = scmp.ne.s32.totalorder %s171, %s173
    %p177 = scmp.eq.s32.totalorder %s15, 0
    %p178 = por %p176, %p177
    %p179 = scmp.ne.s32.totalorder %s171, %s173
    %p180 = scmp.eq.s32.totalorder %s20, 1
    %p181 = por %p179, %p180
    %p182 = scmp.ne.s32.totalorder %s173, %s174
    %p183 = scmp.eq.s32.totalorder %s20, 0
    %p184 = por %p182, %p183
    %p185 = scmp.ne.s32.totalorder %s173, %s174
    %p186 = scmp.eq.s32.totalorder %s21, 1
    %p187 = por %p185, %p186
    %p189 = scmp.ne.s32.totalorder %s174, %s188
    %p190 = scmp.eq.s32.totalorder %s21, 0
    %p191 = por %p189, %p190
    %s193 = sadd.s32 %s192, 1
    %p196 = scmp.eq.s32.totalorder %s15, 1
    %p197 = scmp.ne.s32.totalorder %s192, %s194
    %p198 = scmp.eq.s32.totalorder %s15, 0
    %p199 = por %p197, %p198
    %p200 = scmp.ne.s32.totalorder %s192, %s194
    %p201 = scmp.eq.s32.totalorder %s20, 1
    %p202 = por %p200, %p201
    %p203 = scmp.ne.s32.totalorder %s194, %s195
    %p204 = scmp.eq.s32.totalorder %s20, 0
    %p205 = por %p203, %p204
    %p206 = scmp.ne.s32.totalorder %s194, %s195
    %p207 = scmp.eq.s32.totalorder %s21, 1
    %p208 = por %p206, %p207
    %p210 = scmp.ne.s32.totalorder %s195, %s209
    %p211 = scmp.eq.s32.totalorder %s21, 0
    %p212 = por %p210, %p211
    %p213 = scmp.le.s32.totalorder 1, %s15
    %p214 = scmp.lt.s32.totalorder %s15, 3
    %p215 = pnand %p213, %p214
    %p216 = pneg %p215
    // Predicated region
    $region9: #{_forward_impl.1} parent=5 // pred_check
      _
    $region10: #{_forward_impl.1} parent=5 // pred_check_branch
      %218 = sbr.rel (%p215) target = $region12
    $region11: #{_forward_impl.1} parent=5 // pred_region
      %s219 = ssub.s32 %s15, 1
      // Predicated region
      $region13: #{_forward_impl.1} parent=11 // pred_check
        %p220 = pneg %p48
      $region14: #{_forward_impl.1} parent=11 // pred_check_branch
        %222 = sbr.rel (%p220) target = $region16
      $region15: #{_forward_impl.1} parent=11 // pred_region
        _
      $region16: #{_forward_impl.1} parent=11 // pred_fallthru
        _
      // Predicated region
      $region17: #{_forward_impl.1} parent=11 // pred_check
        %p223 = pneg %p121
      $region18: #{_forward_impl.1} parent=11 // pred_check_branch
        %225 = sbr.rel (%p223) target = $region20
      $region19: #{_forward_impl.1} parent=11 // pred_region
        _
      $region20: #{_forward_impl.1} parent=11 // pred_fallthru
        _
      // Predicated region
      $region21: #{_forward_impl.1} parent=11 // pred_check
        %p226 = pneg %p142
      $region22: #{_forward_impl.1} parent=11 // pred_check_branch
        %228 = sbr.rel (%p226) target = $region24
      $region23: #{_forward_impl.1} parent=11 // pred_region
        _
      $region24: #{_forward_impl.1} parent=11 // pred_fallthru
        _
      // Predicated region
      $region25: #{_forward_impl.1} parent=11 // pred_check
        %p229 = pneg %p163
      $region26: #{_forward_impl.1} parent=11 // pred_check_branch
        %231 = sbr.rel (%p229) target = $region28
      $region27: #{_forward_impl.1} parent=11 // pred_region
        _
      $region28: #{_forward_impl.1} parent=11 // pred_fallthru
        _
      // Predicated region
      $region29: #{_forward_impl.1} parent=11 // pred_check
        %p232 = pneg %p184
      $region30: #{_forward_impl.1} parent=11 // pred_check_branch
        %234 = sbr.rel (%p232) target = $region32
      $region31: #{_forward_impl.1} parent=11 // pred_region
        _
      $region32: #{_forward_impl.1} parent=11 // pred_fallthru
        _
    $region12: #{_forward_impl.1} parent=5 // pred_fallthru
      _
    %p235 = scmp.lt.s32.totalorder %s15, 2
    // Predicated region
    $region33: #{_forward_impl.1} parent=5 // pred_check
      %p236 = pneg %p235
    $region34: #{_forward_impl.1} parent=5 // pred_check_branch
      %238 = sbr.rel (%p236) target = $region36
    $region35: #{_forward_impl.1} parent=5 // pred_region
      // Predicated region
      $region37: #{_forward_impl.1} parent=35 // pred_check
        %p239 = pneg %p68
      $region38: #{_forward_impl.1} parent=35 // pred_check_branch
        %241 = sbr.rel (%p239) target = $region40
      $region39: #{_forward_impl.1} parent=35 // pred_region
        %p242 = scmp.lt.s32.totalorder %s22, 1
        %s243 = scalar_select %p242, %s22, 1
        %s244 = smul.addr %s243, 16
        %s245 = smul.addr %s244, 4
        %s246 = scalar_lea.vmem %s3, %s245
      $region40: #{_forward_impl.1} parent=35 // pred_fallthru
        _
      // Predicated region
      $region41: #{_forward_impl.1} parent=35 // pred_check
        %p247 = pneg %p94
      $region42: #{_forward_impl.1} parent=35 // pred_check_branch
        %249 = sbr.rel (%p247) target = $region44
      $region43: #{_forward_impl.1} parent=35 // pred_region
        %p250 = scmp.lt.s32.totalorder %s22, 1
        %s251 = scalar_select %p250, %s22, 1
        %s252 = scalar_lea.vmem %s4, %s251
      $region44: #{_forward_impl.1} parent=35 // pred_fallthru
        _
    $region36: #{_forward_impl.1} parent=5 // pred_fallthru
      _
    %p253 = scmp.le.s32.totalorder 1, %s15
    %p254 = scmp.lt.s32.totalorder %s15, 3
    %p255 = pnand %p253, %p254
    %p256 = pneg %p255
    // Predicated region
    $region45: #{_forward_impl.1} parent=5 // pred_check
      _
    $region46: #{_forward_impl.1} parent=5 // pred_check_branch
      %258 = sbr.rel (%p255) target = $region48
    $region47: #{_forward_impl.1} parent=5 // pred_region
      %s259 = ssub.s32 %s15, 1
      %p260 = pneg %p48
      %p261 = pneg %p45
      %p262 = scmp.lt.s32.totalorder %s24, 1
      %s263 = scalar_select %p262, %s24, 1
      %s264 = smul.addr %s263, 16
      %s265 = smul.addr %s264, 4
      %s266 = scalar_lea.vmem %s3, %s265
      %p267 = pneg %p74
      %p268 = pneg %p71
      %p269 = scmp.lt.s32.totalorder %s24, 1
      %s270 = scalar_select %p269, %s24, 1
      %s271 = scalar_lea.vmem %s4, %s270
      %p272 = pneg %p100
      %p273 = pneg %p97
      %p274 = pneg %p121
      %p275 = pneg %p118
      %p276 = pneg %p142
      %p277 = pneg %p139
      %p278 = pneg %p163
      %p279 = pneg %p160
      %p280 = pneg %p184
      %p281 = pneg %p181
      %p282 = pneg %p205
      %p283 = pneg %p202
      %p284 = scmp.lt.s32.totalorder %s24, 1
      %s285 = scalar_select %p284, %s24, 1
      %s286 = smul.addr %s285, 16
      %s287 = smul.addr %s286, 4
      %s288 = scalar_lea.vmem %s3, %s287
      %p289 = scmp.lt.s32.totalorder %s24, 1
      %s290 = scalar_select %p289, %s24, 1
      %s291 = scalar_lea.vmem %s4, %s290
      %p292 = scmp.eq.s32.totalorder %s24, 0
      %p293 = scmp.eq.s32.totalorder %s25, 0
      %p294 = pnand %p292, %p293
      %p295 = pneg %p294
      // Predicated region
      $region49: #{_forward_impl.1} parent=47 // pred_check
        _
      $region50: #{_forward_impl.1} parent=47 // pred_check_branch
        %297 = sbr.rel (%p294) target = $region52
      $region51: #{_forward_impl.1} parent=47 // pred_region
        // Predicated region
        $region53: #{_forward_impl.1} parent=51 // pred_check
          _
        $region54: #{_forward_impl.1} parent=51 // pred_check_branch
          %299 = sbr.rel (0) target = $region56
        $region55: #{_forward_impl.1} parent=51 // pred_region
          loop: start=0, step=1, limit=1
          $region57: #{_forward_impl.1} parent=55 // loop_pre_header
            _
          $region58: #{_forward_impl.1} parent=55 // loop_header
            %s301 = sphi 0, %s305
            %p302 = scmp.ge.s32.totalorder %s301, 1
            %s306 = sphi %s2, %s2
            %s307 = sphi [#allocation2], [#allocation2]
          $region59: #{_forward_impl.1} parent=55 // loop_header_branch
            %304 = sbr.rel (%p302) target = $region63
          $region60: #{_forward_impl.1} parent=55 // loop_body
            %v308 = vld [vmem:[%s306] sm:$0xff]
            %309 = vst [vmem:[%s307] sm:$0xff] %v308
            %v310 = vld [vmem:[%s306 + $0x8] sm:$0xff]
            %311 = vst [vmem:[%s307 + $0x8] sm:$0xff] %v310
            %v312 = vld [vmem:[%s306 + $0x10] sm:$0xff]
            %313 = vst [vmem:[%s307 + $0x10] sm:$0xff] %v312
            %v314 = vld [vmem:[%s306 + $0x18] sm:$0xff]
            %315 = vst [vmem:[%s307 + $0x18] sm:$0xff] %v314
            %v316 = vld [vmem:[%s306 + $0x20] sm:$0xff]
            %317 = vst [vmem:[%s307 + $0x20] sm:$0xff] %v316
            %v318 = vld [vmem:[%s306 + $0x28] sm:$0xff]
            %319 = vst [vmem:[%s307 + $0x28] sm:$0xff] %v318
            %v320 = vld [vmem:[%s306 + $0x30] sm:$0xff]
            %321 = vst [vmem:[%s307 + $0x30] sm:$0xff] %v320
            %v322 = vld [vmem:[%s306 + $0x38] sm:$0xff]
            %323 = vst [vmem:[%s307 + $0x38] sm:$0xff] %v322
            %v324 = vld [vmem:[%s306 + $0x40] sm:$0xff]
            %325 = vst [vmem:[%s307 + $0x40] sm:$0xff] %v324
            %v326 = vld [vmem:[%s306 + $0x48] sm:$0xff]
            %327 = vst [vmem:[%s307 + $0x48] sm:$0xff] %v326
            %v328 = vld [vmem:[%s306 + $0x50] sm:$0xff]
            %329 = vst [vmem:[%s307 + $0x50] sm:$0xff] %v328
            %v330 = vld [vmem:[%s306 + $0x58] sm:$0xff]
            %331 = vst [vmem:[%s307 + $0x58] sm:$0xff] %v330
            %v332 = vld [vmem:[%s306 + $0x60] sm:$0xff]
            %333 = vst [vmem:[%s307 + $0x60] sm:$0xff] %v332
            %v334 = vld [vmem:[%s306 + $0x68] sm:$0xff]
            %335 = vst [vmem:[%s307 + $0x68] sm:$0xff] %v334
            %v336 = vld [vmem:[%s306 + $0x70] sm:$0xff]
            %337 = vst [vmem:[%s307 + $0x70] sm:$0xff] %v336
            %v338 = vld [vmem:[%s306 + $0x78] sm:$0xff]
            %339 = vst [vmem:[%s307 + $0x78] sm:$0xff] %v338
            %v340 = vld [vmem:[%s306 + $0x80] sm:$0xff]
            %341 = vst [vmem:[%s307 + $0x80] sm:$0xff] %v340
            %v342 = vld [vmem:[%s306 + $0x88] sm:$0xff]
            %343 = vst [vmem:[%s307 + $0x88] sm:$0xff] %v342
            %v344 = vld [vmem:[%s306 + $0x90] sm:$0xff]
            %345 = vst [vmem:[%s307 + $0x90] sm:$0xff] %v344
            %v346 = vld [vmem:[%s306 + $0x98] sm:$0xff]
            %347 = vst [vmem:[%s307 + $0x98] sm:$0xff] %v346
            %v348 = vld [vmem:[%s306 + $0xa0] sm:$0xff]
            %349 = vst [vmem:[%s307 + $0xa0] sm:$0xff] %v348
            %v350 = vld [vmem:[%s306 + $0xa8] sm:$0xff]
            %351 = vst [vmem:[%s307 + $0xa8] sm:$0xff] %v350
            %v352 = vld [vmem:[%s306 + $0xb0] sm:$0xff]
            %353 = vst [vmem:[%s307 + $0xb0] sm:$0xff] %v352
            %v354 = vld [vmem:[%s306 + $0xb8] sm:$0xff]
            %355 = vst [vmem:[%s307 + $0xb8] sm:$0xff] %v354
            %v356 = vld [vmem:[%s306 + $0xc0] sm:$0xff]
            %357 = vst [vmem:[%s307 + $0xc0] sm:$0xff] %v356
            %v358 = vld [vmem:[%s306 + $0xc8] sm:$0xff]
            %359 = vst [vmem:[%s307 + $0xc8] sm:$0xff] %v358
            %v360 = vld [vmem:[%s306 + $0xd0] sm:$0xff]
            %361 = vst [vmem:[%s307 + $0xd0] sm:$0xff] %v360
            %v362 = vld [vmem:[%s306 + $0xd8] sm:$0xff]
            %363 = vst [vmem:[%s307 + $0xd8] sm:$0xff] %v362
            %v364 = vld [vmem:[%s306 + $0xe0] sm:$0xff]
            %365 = vst [vmem:[%s307 + $0xe0] sm:$0xff] %v364
            %v366 = vld [vmem:[%s306 + $0xe8] sm:$0xff]
            %367 = vst [vmem:[%s307 + $0xe8] sm:$0xff] %v366
            %v368 = vld [vmem:[%s306 + $0xf0] sm:$0xff]
            %369 = vst [vmem:[%s307 + $0xf0] sm:$0xff] %v368
            %v370 = vld [vmem:[%s306 + $0xf8] sm:$0xff]
            %371 = vst [vmem:[%s307 + $0xf8] sm:$0xff] %v370
          $region61: #{_forward_impl.1} parent=55 // loop_footer
            %s305 = sadd.s32 1, %s301
          $region62: #{_forward_impl.1} parent=55 // loop_footer_branch
            %300 = sbr.rel target = $region58
          $region63: #{_forward_impl.1} parent=55 // loop_exit
            _
        $region56: #{_forward_impl.1} parent=51 // pred_fallthru
          _
        // Predicated region
        $region64: #{_forward_impl.1} parent=51 // pred_check
          _
        $region65: #{_forward_impl.1} parent=51 // pred_check_branch
          %373 = sbr.rel target = $region67
        $region66: #{_forward_impl.1} parent=51 // pred_region
          _
        $region67: #{_forward_impl.1} parent=51 // pred_fallthru
          _
        // Predicated region
        $region68: #{_forward_impl.1} parent=51 // pred_check
          _
        $region69: #{_forward_impl.1} parent=51 // pred_check_branch
          %376 = sbr.rel (0) target = $region71
        $region70: #{_forward_impl.1} parent=51 // pred_region
          %377 = vsyncadd [#allocation5], 4096
        $region71: #{_forward_impl.1} parent=51 // pred_fallthru
          _
        %s378 = scalar_lea.sflag [#allocation5], 1
        // Predicated region
        $region72: #{_forward_impl.1} parent=51 // pred_check
          _
        $region73: #{_forward_impl.1} parent=51 // pred_check_branch
          %380 = sbr.rel (0) target = $region75
        $region74: #{_forward_impl.1} parent=51 // pred_region
          loop: start=0, step=1, limit=1
          $region76: #{_forward_impl.1} parent=74 // loop_pre_header
            _
          $region77: #{_forward_impl.1} parent=74 // loop_header
            %s382 = sphi 0, %s386
            %p383 = scmp.ge.s32.totalorder %s382, 1
            %s387 = sphi %s1, %s1
            %s388 = sphi [#allocation3], [#allocation3]
          $region78: #{_forward_impl.1} parent=74 // loop_header_branch
            %385 = sbr.rel (%p383) target = $region82
          $region79: #{_forward_impl.1} parent=74 // loop_body
            %v389 = vld [vmem:[%s387] sm:$0xff]
            %390 = vst [vmem:[%s388] sm:$0xff] %v389
            %v391 = vld [vmem:[%s387 + $0x8] sm:$0xff]
            %392 = vst [vmem:[%s388 + $0x8] sm:$0xff] %v391
            %v393 = vld [vmem:[%s387 + $0x10] sm:$0xff]
            %394 = vst [vmem:[%s388 + $0x10] sm:$0xff] %v393
            %v395 = vld [vmem:[%s387 + $0x18] sm:$0xff]
            %396 = vst [vmem:[%s388 + $0x18] sm:$0xff] %v395
            %v397 = vld [vmem:[%s387 + $0x20] sm:$0xff]
            %398 = vst [vmem:[%s388 + $0x20] sm:$0xff] %v397
            %v399 = vld [vmem:[%s387 + $0x28] sm:$0xff]
            %400 = vst [vmem:[%s388 + $0x28] sm:$0xff] %v399
            %v401 = vld [vmem:[%s387 + $0x30] sm:$0xff]
            %402 = vst [vmem:[%s388 + $0x30] sm:$0xff] %v401
            %v403 = vld [vmem:[%s387 + $0x38] sm:$0xff]
            %404 = vst [vmem:[%s388 + $0x38] sm:$0xff] %v403
            %v405 = vld [vmem:[%s387 + $0x40] sm:$0xff]
            %406 = vst [vmem:[%s388 + $0x40] sm:$0xff] %v405
            %v407 = vld [vmem:[%s387 + $0x48] sm:$0xff]
            %408 = vst [vmem:[%s388 + $0x48] sm:$0xff] %v407
            %v409 = vld [vmem:[%s387 + $0x50] sm:$0xff]
            %410 = vst [vmem:[%s388 + $0x50] sm:$0xff] %v409
            %v411 = vld [vmem:[%s387 + $0x58] sm:$0xff]
            %412 = vst [vmem:[%s388 + $0x58] sm:$0xff] %v411
            %v413 = vld [vmem:[%s387 + $0x60] sm:$0xff]
            %414 = vst [vmem:[%s388 + $0x60] sm:$0xff] %v413
            %v415 = vld [vmem:[%s387 + $0x68] sm:$0xff]
            %416 = vst [vmem:[%s388 + $0x68] sm:$0xff] %v415
            %v417 = vld [vmem:[%s387 + $0x70] sm:$0xff]
            %418 = vst [vmem:[%s388 + $0x70] sm:$0xff] %v417
            %v419 = vld [vmem:[%s387 + $0x78] sm:$0xff]
            %420 = vst [vmem:[%s388 + $0x78] sm:$0xff] %v419
          $region80: #{_forward_impl.1} parent=74 // loop_footer
            %s386 = sadd.s32 1, %s382
          $region81: #{_forward_impl.1} parent=74 // loop_footer_branch
            %381 = sbr.rel target = $region77
          $region82: #{_forward_impl.1} parent=74 // loop_exit
            _
        $region75: #{_forward_impl.1} parent=51 // pred_fallthru
          _
        // Predicated region
        $region83: #{_forward_impl.1} parent=51 // pred_check
          _
        $region84: #{_forward_impl.1} parent=51 // pred_check_branch
          %422 = sbr.rel target = $region86
        $region85: #{_forward_impl.1} parent=51 // pred_region
          _
        $region86: #{_forward_impl.1} parent=51 // pred_fallthru
          _
        // Predicated region
        $region87: #{_forward_impl.1} parent=51 // pred_check
          _
        $region88: #{_forward_impl.1} parent=51 // pred_check_branch
          %425 = sbr.rel (0) target = $region90
        $region89: #{_forward_impl.1} parent=51 // pred_region
          %426 = vsyncadd %s378, 2048
        $region90: #{_forward_impl.1} parent=51 // pred_fallthru
          _
        %s427 = smul.u32 4, 32
        %s428 = smul.u32 %s427, 1
        %s429 = sshll.u32 %s428, 4
        %430 = dma.done %s378, %s429
        %s431 = smul.u32 %s427, 2
        %s432 = sshll.u32 %s431, 4
        %433 = dma.done [#allocation5], %s432
      $region52: #{_forward_impl.1} parent=47 // pred_fallthru
        _
      // Predicated region
      $region91: #{_forward_impl.1} parent=47 // pred_check
        %p434 = pneg %p293
      $region92: #{_forward_impl.1} parent=47 // pred_check_branch
        %436 = sbr.rel (%p434) target = $region94
      $region93: #{_forward_impl.1} parent=47 // pred_region
        %v437 = vld [vmem:[#allocation3] sm:$0xf]
        %v438 = vld [vmem:[#allocation3 + $0x4] sm:$0xf]
        %v439 = vld [vmem:[#allocation3 + $0x8] sm:$0xf]
        %v440 = vld [vmem:[#allocation3 + $0xc] sm:$0xf]
        %v441 = vld [vmem:[#allocation3 + $0x10] sm:$0xf]
        %v442 = vld [vmem:[#allocation3 + $0x14] sm:$0xf]
        %v443 = vld [vmem:[#allocation3 + $0x18] sm:$0xf]
        %v444 = vld [vmem:[#allocation3 + $0x1c] sm:$0xf]
        %v445 = vld [vmem:[#allocation3 + $0x20] sm:$0xf]
        %v446 = vld [vmem:[#allocation3 + $0x24] sm:$0xf]
        %v447 = vld [vmem:[#allocation3 + $0x28] sm:$0xf]
        %v448 = vld [vmem:[#allocation3 + $0x2c] sm:$0xf]
        %v449 = vld [vmem:[#allocation3 + $0x30] sm:$0xf]
        %v450 = vld [vmem:[#allocation3 + $0x34] sm:$0xf]
        %v451 = vld [vmem:[#allocation3 + $0x38] sm:$0xf]
        %v452 = vld [vmem:[#allocation3 + $0x3c] sm:$0xf]
        %v453 = vld [vmem:[#allocation3 + $0x40] sm:$0xf]
        %v454 = vld [vmem:[#allocation3 + $0x44] sm:$0xf]
        %v455 = vld [vmem:[#allocation3 + $0x48] sm:$0xf]
        %v456 = vld [vmem:[#allocation3 + $0x4c] sm:$0xf]
        %v457 = vld [vmem:[#allocation3 + $0x50] sm:$0xf]
        %v458 = vld [vmem:[#allocation3 + $0x54] sm:$0xf]
        %v459 = vld [vmem:[#allocation3 + $0x58] sm:$0xf]
        %v460 = vld [vmem:[#allocation3 + $0x5c] sm:$0xf]
        %v461 = vld [vmem:[#allocation3 + $0x60] sm:$0xf]
        %v462 = vld [vmem:[#allocation3 + $0x64] sm:$0xf]
        %v463 = vld [vmem:[#allocation3 + $0x68] sm:$0xf]
        %v464 = vld [vmem:[#allocation3 + $0x6c] sm:$0xf]
        %v465 = vld [vmem:[#allocation3 + $0x70] sm:$0xf]
        %v466 = vld [vmem:[#allocation3 + $0x74] sm:$0xf]
        %v467 = vld [vmem:[#allocation3 + $0x78] sm:$0xf]
        %v468 = vld [vmem:[#allocation3 + $0x7c] sm:$0xf]
        %v469 = vld [vmem:[%s288] sm:$0xf]
        %v470 = vld [vmem:[%s288 + $0x4] sm:$0xf]
        %v471 = vld [vmem:[%s288 + $0x8] sm:$0xf]
        %v472 = vld [vmem:[%s288 + $0xc] sm:$0xf]
        %v473 = vld [vmem:[%s288 + $0x10] sm:$0xf]
        %v474 = vld [vmem:[%s288 + $0x14] sm:$0xf]
        %v475 = vld [vmem:[%s288 + $0x18] sm:$0xf]
        %v476 = vld [vmem:[%s288 + $0x1c] sm:$0xf]
        %v477 = vld [vmem:[%s288 + $0x20] sm:$0xf]
        %v478 = vld [vmem:[%s288 + $0x24] sm:$0xf]
        %v479 = vld [vmem:[%s288 + $0x28] sm:$0xf]
        %v480 = vld [vmem:[%s288 + $0x2c] sm:$0xf]
        %v481 = vld [vmem:[%s288 + $0x30] sm:$0xf]
        %v482 = vld [vmem:[%s288 + $0x34] sm:$0xf]
        %v483 = vld [vmem:[%s288 + $0x38] sm:$0xf]
        %v484 = vld [vmem:[%s288 + $0x3c] sm:$0xf]
        %v517 = vunpack.c.l.b16 %v437
        %v518 = vunpack.c.l.b16 %v438
        %v519 = vunpack.c.l.b16 %v439
        %v520 = vunpack.c.l.b16 %v440
        %v521 = vunpack.c.l.b16 %v441
        %v522 = vunpack.c.l.b16 %v442
        %v523 = vunpack.c.l.b16 %v443
        %v524 = vunpack.c.l.b16 %v444
        %v525 = vunpack.c.l.b16 %v445
        %v526 = vunpack.c.l.b16 %v446
        %v527 = vunpack.c.l.b16 %v447
        %v528 = vunpack.c.l.b16 %v448
        %v529 = vunpack.c.l.b16 %v449
        %v530 = vunpack.c.l.b16 %v450
        %v531 = vunpack.c.l.b16 %v451
        %v532 = vunpack.c.l.b16 %v452
        %v533 = vunpack.c.l.b16 %v453
        %v534 = vunpack.c.l.b16 %v454
        %v535 = vunpack.c.l.b16 %v455
        %v536 = vunpack.c.l.b16 %v456
        %v537 = vunpack.c.l.b16 %v457
        %v538 = vunpack.c.l.b16 %v458
        %v539 = vunpack.c.l.b16 %v459
        %v540 = vunpack.c.l.b16 %v460
        %v541 = vunpack.c.l.b16 %v461
        %v542 = vunpack.c.l.b16 %v462
        %v543 = vunpack.c.l.b16 %v463
        %v544 = vunpack.c.l.b16 %v464
        %v545 = vunpack.c.l.b16 %v465
        %v546 = vunpack.c.l.b16 %v466
        %v547 = vunpack.c.l.b16 %v467
        %v548 = vunpack.c.l.b16 %v468
        %v549 = vpack.c.b16 %v518, %v517
        %v550 = vpack.c.b16 %v520, %v519
        %v551 = vpack.c.b16 %v522, %v521
        %v552 = vpack.c.b16 %v524, %v523
        %v553 = vpack.c.b16 %v526, %v525
        %v554 = vpack.c.b16 %v528, %v527
        %v555 = vpack.c.b16 %v530, %v529
        %v556 = vpack.c.b16 %v532, %v531
        %v557 = vpack.c.b16 %v534, %v533
        %v558 = vpack.c.b16 %v536, %v535
        %v559 = vpack.c.b16 %v538, %v537
        %v560 = vpack.c.b16 %v540, %v539
        %v561 = vpack.c.b16 %v542, %v541
        %v562 = vpack.c.b16 %v544, %v543
        %v563 = vpack.c.b16 %v546, %v545
        %v564 = vpack.c.b16 %v548, %v547
        %v597 = vunpack.c.l.b16 %v469
        %v598 = vunpack.c.l.b16 %v470
        %v599 = vunpack.c.l.b16 %v471
        %v600 = vunpack.c.l.b16 %v472
        %v601 = vunpack.c.l.b16 %v473
        %v602 = vunpack.c.l.b16 %v474
        %v603 = vunpack.c.l.b16 %v475
        %v604 = vunpack.c.l.b16 %v476
        %v605 = vunpack.c.l.b16 %v477
        %v606 = vunpack.c.l.b16 %v478
        %v607 = vunpack.c.l.b16 %v479
        %v608 = vunpack.c.l.b16 %v480
        %v609 = vunpack.c.l.b16 %v481
        %v610 = vunpack.c.l.b16 %v482
        %v611 = vunpack.c.l.b16 %v483
        %v612 = vunpack.c.l.b16 %v484
        %v613 = vpack.c.b16 %v598, %v597
        %v614 = vpack.c.b16 %v600, %v599
        %v615 = vpack.c.b16 %v602, %v601
        %v616 = vpack.c.b16 %v604, %v603
        %v617 = vpack.c.b16 %v606, %v605
        %v618 = vpack.c.b16 %v608, %v607
        %v619 = vpack.c.b16 %v610, %v609
        %v620 = vpack.c.b16 %v612, %v611
        %629 = vmatpush.bf16.msra.mxu0 %v620
        %630 = vmatpush.bf16.msra.mxu0 %v619
        %631 = vmatpush.bf16.msra.mxu0 %v618
        %632 = vmatpush.bf16.msra.mxu0 %v617
        %633 = vmatpush.bf16.msra.mxu0 %v616
        %634 = vmatpush.bf16.msra.mxu0 %v615
        %635 = vmatpush.bf16.msra.mxu0 %v614
        %636 = vmatpush.bf16.msra.mxu0 %v613
        %637 = vmatmul.bf16.gmra.mxu0 %v549
        %v638 = vpop.f32.mrf.mxu0
        %v639 = vadd.f32 0.0, %v638
        %v640 = vpop.f32.mrf.mxu0
        %v641 = vadd.f32 0.0, %v640
        %642 = vmatmul.bf16.gmra.mxu0 %v550
        %v643 = vpop.f32.mrf.mxu0
        %v644 = vadd.f32 0.0, %v643
        %v645 = vpop.f32.mrf.mxu0
        %v646 = vadd.f32 0.0, %v645
        %647 = vmatmul.bf16.gmra.mxu0 %v551
        %v648 = vpop.f32.mrf.mxu0
        %v649 = vadd.f32 0.0, %v648
        %v650 = vpop.f32.mrf.mxu0
        %v651 = vadd.f32 0.0, %v650
        %652 = vmatmul.bf16.gmra.mxu0 %v552
        %v653 = vpop.f32.mrf.mxu0
        %v654 = vadd.f32 0.0, %v653
        %v655 = vpop.f32.mrf.mxu0
        %v656 = vadd.f32 0.0, %v655
        %657 = vmatmul.bf16.gmra.mxu0 %v553
        %v658 = vpop.f32.mrf.mxu0
        %v659 = vadd.f32 0.0, %v658
        %v660 = vpop.f32.mrf.mxu0
        %v661 = vadd.f32 0.0, %v660
        %662 = vmatmul.bf16.gmra.mxu0 %v554
        %v663 = vpop.f32.mrf.mxu0
        %v664 = vadd.f32 0.0, %v663
        %v665 = vpop.f32.mrf.mxu0
        %v666 = vadd.f32 0.0, %v665
        %667 = vmatmul.bf16.gmra.mxu0 %v555
        %v668 = vpop.f32.mrf.mxu0
        %v669 = vadd.f32 0.0, %v668
        %v670 = vpop.f32.mrf.mxu0
        %v671 = vadd.f32 0.0, %v670
        %672 = vmatmul.bf16.gmra.mxu0 %v556
        %v673 = vpop.f32.mrf.mxu0
        %v674 = vadd.f32 0.0, %v673
        %v675 = vpop.f32.mrf.mxu0
        %v676 = vadd.f32 0.0, %v675
        %677 = vmatmul.bf16.gmra.mxu0 %v557
        %v678 = vpop.f32.mrf.mxu0
        %v679 = vadd.f32 0.0, %v678
        %v680 = vpop.f32.mrf.mxu0
        %v681 = vadd.f32 0.0, %v680
        %682 = vmatmul.bf16.gmra.mxu0 %v558
        %v683 = vpop.f32.mrf.mxu0
        %v684 = vadd.f32 0.0, %v683
        %v685 = vpop.f32.mrf.mxu0
        %v686 = vadd.f32 0.0, %v685
        %687 = vmatmul.bf16.gmra.mxu0 %v559
        %v688 = vpop.f32.mrf.mxu0
        %v689 = vadd.f32 0.0, %v688
        %v690 = vpop.f32.mrf.mxu0
        %v691 = vadd.f32 0.0, %v690
        %692 = vmatmul.bf16.gmra.mxu0 %v560
        %v693 = vpop.f32.mrf.mxu0
        %v694 = vadd.f32 0.0, %v693
        %v695 = vpop.f32.mrf.mxu0
        %v696 = vadd.f32 0.0, %v695
        %697 = vmatmul.bf16.gmra.mxu0 %v561
        %v698 = vpop.f32.mrf.mxu0
        %v699 = vadd.f32 0.0, %v698
        %v700 = vpop.f32.mrf.mxu0
        %v701 = vadd.f32 0.0, %v700
        %702 = vmatmul.bf16.gmra.mxu0 %v562
        %v703 = vpop.f32.mrf.mxu0
        %v704 = vadd.f32 0.0, %v703
        %v705 = vpop.f32.mrf.mxu0
        %v706 = vadd.f32 0.0, %v705
        %707 = vmatmul.bf16.gmra.mxu0 %v563
        %v708 = vpop.f32.mrf.mxu0
        %v709 = vadd.f32 0.0, %v708
        %v710 = vpop.f32.mrf.mxu0
        %v711 = vadd.f32 0.0, %v710
        %712 = vmatmul.bf16.gmra.mxu0 %v564
        %v713 = vpop.f32.mrf.mxu0
        %v714 = vadd.f32 0.0, %v713
        %v715 = vpop.f32.mrf.mxu0
        %v716 = vadd.f32 0.0, %v715
        %717 = vdwg.mxu0
        %v718 = vpack.c.bf16 %v639, %v639
        %v719 = vpack.c.bf16 %v641, %v641
        %v720 = vpack.c.bf16 %v644, %v644
        %v721 = vpack.c.bf16 %v646, %v646
        %v722 = vpack.c.bf16 %v649, %v649
        %v723 = vpack.c.bf16 %v651, %v651
        %v724 = vpack.c.bf16 %v654, %v654
        %v725 = vpack.c.bf16 %v656, %v656
        %v726 = vpack.c.bf16 %v659, %v659
        %v727 = vpack.c.bf16 %v661, %v661
        %v728 = vpack.c.bf16 %v664, %v664
        %v729 = vpack.c.bf16 %v666, %v666
        %v730 = vpack.c.bf16 %v669, %v669
        %v731 = vpack.c.bf16 %v671, %v671
        %v732 = vpack.c.bf16 %v674, %v674
        %v733 = vpack.c.bf16 %v676, %v676
        %v734 = vpack.c.bf16 %v679, %v679
        %v735 = vpack.c.bf16 %v681, %v681
        %v736 = vpack.c.bf16 %v684, %v684
        %v737 = vpack.c.bf16 %v686, %v686
        %v738 = vpack.c.bf16 %v689, %v689
        %v739 = vpack.c.bf16 %v691, %v691
        %v740 = vpack.c.bf16 %v694, %v694
        %v741 = vpack.c.bf16 %v696, %v696
        %v742 = vpack.c.bf16 %v699, %v699
        %v743 = vpack.c.bf16 %v701, %v701
        %v744 = vpack.c.bf16 %v704, %v704
        %v745 = vpack.c.bf16 %v706, %v706
        %v746 = vpack.c.bf16 %v709, %v709
        %v747 = vpack.c.bf16 %v711, %v711
        %v748 = vpack.c.bf16 %v714, %v714
        %v749 = vpack.c.bf16 %v716, %v716
        %750 = vst [vmem:[#allocation4] sm:$0xf] %v718
        %751 = vst [vmem:[#allocation4 + $0x4] sm:$0xf] %v719
        %752 = vst [vmem:[#allocation4 + $0x8] sm:$0xf] %v720
        %753 = vst [vmem:[#allocation4 + $0xc] sm:$0xf] %v721
        %754 = vst [vmem:[#allocation4 + $0x10] sm:$0xf] %v722
        %755 = vst [vmem:[#allocation4 + $0x14] sm:$0xf] %v723
        %756 = vst [vmem:[#allocation4 + $0x18] sm:$0xf] %v724
        %757 = vst [vmem:[#allocation4 + $0x1c] sm:$0xf] %v725
        %758 = vst [vmem:[#allocation4 + $0x20] sm:$0xf] %v726
        %759 = vst [vmem:[#allocation4 + $0x24] sm:$0xf] %v727
        %760 = vst [vmem:[#allocation4 + $0x28] sm:$0xf] %v728
        %761 = vst [vmem:[#allocation4 + $0x2c] sm:$0xf] %v729
        %762 = vst [vmem:[#allocation4 + $0x30] sm:$0xf] %v730
        %763 = vst [vmem:[#allocation4 + $0x34] sm:$0xf] %v731
        %764 = vst [vmem:[#allocation4 + $0x38] sm:$0xf] %v732
        %765 = vst [vmem:[#allocation4 + $0x3c] sm:$0xf] %v733
        %766 = vst [vmem:[#allocation4 + $0x40] sm:$0xf] %v734
        %767 = vst [vmem:[#allocation4 + $0x44] sm:$0xf] %v735
        %768 = vst [vmem:[#allocation4 + $0x48] sm:$0xf] %v736
        %769 = vst [vmem:[#allocation4 + $0x4c] sm:$0xf] %v737
        %770 = vst [vmem:[#allocation4 + $0x50] sm:$0xf] %v738
        %771 = vst [vmem:[#allocation4 + $0x54] sm:$0xf] %v739
        %772 = vst [vmem:[#allocation4 + $0x58] sm:$0xf] %v740
        %773 = vst [vmem:[#allocation4 + $0x5c] sm:$0xf] %v741
        %774 = vst [vmem:[#allocation4 + $0x60] sm:$0xf] %v742
        %775 = vst [vmem:[#allocation4 + $0x64] sm:$0xf] %v743
        %776 = vst [vmem:[#allocation4 + $0x68] sm:$0xf] %v744
        %777 = vst [vmem:[#allocation4 + $0x6c] sm:$0xf] %v745
        %778 = vst [vmem:[#allocation4 + $0x70] sm:$0xf] %v746
        %779 = vst [vmem:[#allocation4 + $0x74] sm:$0xf] %v747
        %780 = vst [vmem:[#allocation4 + $0x78] sm:$0xf] %v748
        %781 = vst [vmem:[#allocation4 + $0x7c] sm:$0xf] %v749
      $region94: #{_forward_impl.1} parent=47 // pred_fallthru
        _
      %s782 = smul.u32 %s25, 256
      %s783 = sshra.s32 %s782, 3
      %s784 = sand.u32 %s782, 7
      %s785 = smul.u32 %s783, 2
      %s786 = smul.addr %s785, 4
      %s787 = scalar_lea.vmem [#allocation2], %s786
      %v788 = vld [vmem:[%s787] sm:$0xff]
      %v789 = vld [vmem:[%s787 + $0x8] sm:$0xff]
      %v790 = vld [vmem:[%s787 + $0x10] sm:$0xff]
      %v791 = vld [vmem:[%s787 + $0x18] sm:$0xff]
      %v792 = vld [vmem:[%s787 + $0x20] sm:$0xff]
      %v793 = vld [vmem:[%s787 + $0x28] sm:$0xff]
      %v794 = vld [vmem:[%s787 + $0x30] sm:$0xff]
      %v795 = vld [vmem:[%s787 + $0x38] sm:$0xff]
      %v796 = vld [vmem:[%s787 + $0x40] sm:$0xff]
      %v797 = vld [vmem:[%s787 + $0x48] sm:$0xff]
      %v798 = vld [vmem:[%s787 + $0x50] sm:$0xff]
      %v799 = vld [vmem:[%s787 + $0x58] sm:$0xff]
      %v800 = vld [vmem:[%s787 + $0x60] sm:$0xff]
      %v801 = vld [vmem:[%s787 + $0x68] sm:$0xff]
      %v802 = vld [vmem:[%s787 + $0x70] sm:$0xff]
      %v803 = vld [vmem:[%s787 + $0x78] sm:$0xff]
      %v804 = vld [vmem:[%s787 + $0x80] sm:$0xff]
      %v805 = vld [vmem:[%s787 + $0x88] sm:$0xff]
      %v806 = vld [vmem:[%s787 + $0x90] sm:$0xff]
      %v807 = vld [vmem:[%s787 + $0x98] sm:$0xff]
      %v808 = vld [vmem:[%s787 + $0xa0] sm:$0xff]
      %v809 = vld [vmem:[%s787 + $0xa8] sm:$0xff]
      %v810 = vld [vmem:[%s787 + $0xb0] sm:$0xff]
      %v811 = vld [vmem:[%s787 + $0xb8] sm:$0xff]
      %v812 = vld [vmem:[%s787 + $0xc0] sm:$0xff]
      %v813 = vld [vmem:[%s787 + $0xc8] sm:$0xff]
      %v814 = vld [vmem:[%s787 + $0xd0] sm:$0xff]
      %v815 = vld [vmem:[%s787 + $0xd8] sm:$0xff]
      %v816 = vld [vmem:[%s787 + $0xe0] sm:$0xff]
      %v817 = vld [vmem:[%s787 + $0xe8] sm:$0xff]
      %v818 = vld [vmem:[%s787 + $0xf0] sm:$0xff]
      %v819 = vld [vmem:[%s787 + $0xf8] sm:$0xff]
      %v820 = vld [vmem:[#allocation4] sm:$0xf]
      %v821 = vld [vmem:[#allocation4 + $0x4] sm:$0xf]
      %v822 = vld [vmem:[#allocation4 + $0x8] sm:$0xf]
      %v823 = vld [vmem:[#allocation4 + $0xc] sm:$0xf]
      %v824 = vld [vmem:[#allocation4 + $0x10] sm:$0xf]
      %v825 = vld [vmem:[#allocation4 + $0x14] sm:$0xf]
      %v826 = vld [vmem:[#allocation4 + $0x18] sm:$0xf]
      %v827 = vld [vmem:[#allocation4 + $0x1c] sm:$0xf]
      %v828 = vld [vmem:[#allocation4 + $0x20] sm:$0xf]
      %v829 = vld [vmem:[#allocation4 + $0x24] sm:$0xf]
      %v830 = vld [vmem:[#allocation4 + $0x28] sm:$0xf]
      %v831 = vld [vmem:[#allocation4 + $0x2c] sm:$0xf]
      %v832 = vld [vmem:[#allocation4 + $0x30] sm:$0xf]
      %v833 = vld [vmem:[#allocation4 + $0x34] sm:$0xf]
      %v834 = vld [vmem:[#allocation4 + $0x38] sm:$0xf]
      %v835 = vld [vmem:[#allocation4 + $0x3c] sm:$0xf]
      %v836 = vld [vmem:[#allocation4 + $0x40] sm:$0xf]
      %v837 = vld [vmem:[#allocation4 + $0x44] sm:$0xf]
      %v838 = vld [vmem:[#allocation4 + $0x48] sm:$0xf]
      %v839 = vld [vmem:[#allocation4 + $0x4c] sm:$0xf]
      %v840 = vld [vmem:[#allocation4 + $0x50] sm:$0xf]
      %v841 = vld [vmem:[#allocation4 + $0x54] sm:$0xf]
      %v842 = vld [vmem:[#allocation4 + $0x58] sm:$0xf]
      %v843 = vld [vmem:[#allocation4 + $0x5c] sm:$0xf]
      %v844 = vld [vmem:[#allocation4 + $0x60] sm:$0xf]
      %v845 = vld [vmem:[#allocation4 + $0x64] sm:$0xf]
      %v846 = vld [vmem:[#allocation4 + $0x68] sm:$0xf]
      %v847 = vld [vmem:[#allocation4 + $0x6c] sm:$0xf]
      %v848 = vld [vmem:[#allocation4 + $0x70] sm:$0xf]
      %v849 = vld [vmem:[#allocation4 + $0x74] sm:$0xf]
      %v850 = vld [vmem:[#allocation4 + $0x78] sm:$0xf]
      %v851 = vld [vmem:[#allocation4 + $0x7c] sm:$0xf]
      %v852 = vld [vmem:[%s291] sm:$0x1]
      %v854 = vperm.slane %v852, 0
      %v888 = vunpack.c.l.b16 %v788
      %v889 = vunpack.c.h.b16 %v788
      %v890 = vunpack.c.l.b16 %v789
      %v891 = vunpack.c.h.b16 %v789
      %v892 = vunpack.c.l.b16 %v790
      %v893 = vunpack.c.h.b16 %v790
      %v894 = vunpack.c.l.b16 %v791
      %v895 = vunpack.c.h.b16 %v791
      %v896 = vunpack.c.l.b16 %v792
      %v897 = vunpack.c.h.b16 %v792
      %v898 = vunpack.c.l.b16 %v793
      %v899 = vunpack.c.h.b16 %v793
      %v900 = vunpack.c.l.b16 %v794
      %v901 = vunpack.c.h.b16 %v794
      %v902 = vunpack.c.l.b16 %v795
      %v903 = vunpack.c.h.b16 %v795
      %v904 = vunpack.c.l.b16 %v796
      %v905 = vunpack.c.h.b16 %v796
      %v906 = vunpack.c.l.b16 %v797
      %v907 = vunpack.c.h.b16 %v797
      %v908 = vunpack.c.l.b16 %v798
      %v909 = vunpack.c.h.b16 %v798
      %v910 = vunpack.c.l.b16 %v799
      %v911 = vunpack.c.h.b16 %v799
      %v912 = vunpack.c.l.b16 %v800
      %v913 = vunpack.c.h.b16 %v800
      %v914 = vunpack.c.l.b16 %v801
      %v915 = vunpack.c.h.b16 %v801
      %v916 = vunpack.c.l.b16 %v802
      %v917 = vunpack.c.h.b16 %v802
      %v918 = vunpack.c.l.b16 %v803
      %v919 = vunpack.c.h.b16 %v803
      %v920 = vunpack.c.l.b16 %v804
      %v921 = vunpack.c.h.b16 %v804
      %v922 = vunpack.c.l.b16 %v805
      %v923 = vunpack.c.h.b16 %v805
      %v924 = vunpack.c.l.b16 %v806
      %v925 = vunpack.c.h.b16 %v806
      %v926 = vunpack.c.l.b16 %v807
      %v927 = vunpack.c.h.b16 %v807
      %v928 = vunpack.c.l.b16 %v808
      %v929 = vunpack.c.h.b16 %v808
      %v930 = vunpack.c.l.b16 %v809
      %v931 = vunpack.c.h.b16 %v809
      %v932 = vunpack.c.l.b16 %v810
      %v933 = vunpack.c.h.b16 %v810
      %v934 = vunpack.c.l.b16 %v811
      %v935 = vunpack.c.h.b16 %v811
      %v936 = vunpack.c.l.b16 %v812
      %v937 = vunpack.c.h.b16 %v812
      %v938 = vunpack.c.l.b16 %v813
      %v939 = vunpack.c.h.b16 %v813
      %v940 = vunpack.c.l.b16 %v814
      %v941 = vunpack.c.h.b16 %v814
      %v942 = vunpack.c.l.b16 %v815
      %v943 = vunpack.c.h.b16 %v815
      %v944 = vunpack.c.l.b16 %v816
      %v945 = vunpack.c.h.b16 %v816
      %v946 = vunpack.c.l.b16 %v817
      %v947 = vunpack.c.h.b16 %v817
      %v948 = vunpack.c.l.b16 %v818
      %v949 = vunpack.c.h.b16 %v818
      %v950 = vunpack.c.l.b16 %v819
      %v951 = vunpack.c.h.b16 %v819
      %v952 = vpack.c.b16 %v890, %v888
      %v953 = vpack.c.b16 %v891, %v889
      %v954 = vpack.c.b16 %v894, %v892
      %v955 = vpack.c.b16 %v895, %v893
      %v956 = vpack.c.b16 %v898, %v896
      %v957 = vpack.c.b16 %v899, %v897
      %v958 = vpack.c.b16 %v902, %v900
      %v959 = vpack.c.b16 %v903, %v901
      %v960 = vpack.c.b16 %v906, %v904
      %v961 = vpack.c.b16 %v907, %v905
      %v962 = vpack.c.b16 %v910, %v908
      %v963 = vpack.c.b16 %v911, %v909
      %v964 = vpack.c.b16 %v914, %v912
      %v965 = vpack.c.b16 %v915, %v913
      %v966 = vpack.c.b16 %v918, %v916
      %v967 = vpack.c.b16 %v919, %v917
      %v968 = vpack.c.b16 %v922, %v920
      %v969 = vpack.c.b16 %v923, %v921
      %v970 = vpack.c.b16 %v926, %v924
      %v971 = vpack.c.b16 %v927, %v925
      %v972 = vpack.c.b16 %v930, %v928
      %v973 = vpack.c.b16 %v931, %v929
      %v974 = vpack.c.b16 %v934, %v932
      %v975 = vpack.c.b16 %v935, %v933
      %v976 = vpack.c.b16 %v938, %v936
      %v977 = vpack.c.b16 %v939, %v937
      %v978 = vpack.c.b16 %v942, %v940
      %v979 = vpack.c.b16 %v943, %v941
      %v980 = vpack.c.b16 %v946, %v944
      %v981 = vpack.c.b16 %v947, %v945
      %v982 = vpack.c.b16 %v950, %v948
      %v983 = vpack.c.b16 %v951, %v949
      %v1048 = vunpack.c.l.b16 %v820
      %v1049 = vunpack.c.l.b16 %v821
      %v1050 = vunpack.c.l.b16 %v822
      %v1051 = vunpack.c.l.b16 %v823
      %v1052 = vunpack.c.l.b16 %v824
      %v1053 = vunpack.c.l.b16 %v825
      %v1054 = vunpack.c.l.b16 %v826
      %v1055 = vunpack.c.l.b16 %v827
      %v1056 = vunpack.c.l.b16 %v828
      %v1057 = vunpack.c.l.b16 %v829
      %v1058 = vunpack.c.l.b16 %v830
      %v1059 = vunpack.c.l.b16 %v831
      %v1060 = vunpack.c.l.b16 %v832
      %v1061 = vunpack.c.l.b16 %v833
      %v1062 = vunpack.c.l.b16 %v834
      %v1063 = vunpack.c.l.b16 %v835
      %v1064 = vunpack.c.l.b16 %v836
      %v1065 = vunpack.c.l.b16 %v837
      %v1066 = vunpack.c.l.b16 %v838
      %v1067 = vunpack.c.l.b16 %v839
      %v1068 = vunpack.c.l.b16 %v840
      %v1069 = vunpack.c.l.b16 %v841
      %v1070 = vunpack.c.l.b16 %v842
      %v1071 = vunpack.c.l.b16 %v843
      %v1072 = vunpack.c.l.b16 %v844
      %v1073 = vunpack.c.l.b16 %v845
      %v1074 = vunpack.c.l.b16 %v846
      %v1075 = vunpack.c.l.b16 %v847
      %v1076 = vunpack.c.l.b16 %v848
      %v1077 = vunpack.c.l.b16 %v849
      %v1078 = vunpack.c.l.b16 %v850
      %v1079 = vunpack.c.l.b16 %v851
      %v1080 = vpack.c.b16 %v1049, %v1048
      %v1081 = vpack.c.b16 %v1051, %v1050
      %v1082 = vpack.c.b16 %v1053, %v1052
      %v1083 = vpack.c.b16 %v1055, %v1054
      %v1084 = vpack.c.b16 %v1057, %v1056
      %v1085 = vpack.c.b16 %v1059, %v1058
      %v1086 = vpack.c.b16 %v1061, %v1060
      %v1087 = vpack.c.b16 %v1063, %v1062
      %v1088 = vpack.c.b16 %v1065, %v1064
      %v1089 = vpack.c.b16 %v1067, %v1066
      %v1090 = vpack.c.b16 %v1069, %v1068
      %v1091 = vpack.c.b16 %v1071, %v1070
      %v1092 = vpack.c.b16 %v1073, %v1072
      %v1093 = vpack.c.b16 %v1075, %v1074
      %v1094 = vpack.c.b16 %v1077, %v1076
      %v1095 = vpack.c.b16 %v1079, %v1078
      %1112 = vmatpush.bf16.msra.mxu0 %v1087
      %1113 = vmatpush.bf16.msra.mxu0 %v1086
      %1114 = vmatpush.bf16.msra.mxu0 %v1085
      %1115 = vmatpush.bf16.msra.mxu0 %v1084
      %1116 = vmatpush.bf16.msra.mxu0 %v1083
      %1117 = vmatpush.bf16.msra.mxu0 %v1082
      %1118 = vmatpush.bf16.msra.mxu0 %v1081
      %1119 = vmatpush.bf16.msra.mxu0 %v1080
      %1120 = vmatmul.bf16.gmra.mxu0 %v952
      %v1121 = vpop.f32.mrf.mxu0
      %v1122 = vadd.f32 %v854, %v1121
      %v1123 = vpop.f32.mrf.mxu0
      %v1124 = vadd.f32 %v854, %v1123
      %1125 = vmatmul.bf16.gmra.mxu0 %v954
      %v1126 = vpop.f32.mrf.mxu0
      %v1127 = vadd.f32 %v854, %v1126
      %v1128 = vpop.f32.mrf.mxu0
      %v1129 = vadd.f32 %v854, %v1128
      %1130 = vmatmul.bf16.gmra.mxu0 %v956
      %v1131 = vpop.f32.mrf.mxu0
      %v1132 = vadd.f32 %v854, %v1131
      %v1133 = vpop.f32.mrf.mxu0
      %v1134 = vadd.f32 %v854, %v1133
      %1135 = vmatmul.bf16.gmra.mxu0 %v958
      %v1136 = vpop.f32.mrf.mxu0
      %v1137 = vadd.f32 %v854, %v1136
      %v1138 = vpop.f32.mrf.mxu0
      %v1139 = vadd.f32 %v854, %v1138
      %1140 = vmatmul.bf16.gmra.mxu0 %v960
      %v1141 = vpop.f32.mrf.mxu0
      %v1142 = vadd.f32 %v854, %v1141
      %v1143 = vpop.f32.mrf.mxu0
      %v1144 = vadd.f32 %v854, %v1143
      %1145 = vmatmul.bf16.gmra.mxu0 %v962
      %v1146 = vpop.f32.mrf.mxu0
      %v1147 = vadd.f32 %v854, %v1146
      %v1148 = vpop.f32.mrf.mxu0
      %v1149 = vadd.f32 %v854, %v1148
      %1150 = vmatmul.bf16.gmra.mxu0 %v964
      %v1151 = vpop.f32.mrf.mxu0
      %v1152 = vadd.f32 %v854, %v1151
      %v1153 = vpop.f32.mrf.mxu0
      %v1154 = vadd.f32 %v854, %v1153
      %1155 = vmatmul.bf16.gmra.mxu0 %v966
      %v1156 = vpop.f32.mrf.mxu0
      %v1157 = vadd.f32 %v854, %v1156
      %v1158 = vpop.f32.mrf.mxu0
      %v1159 = vadd.f32 %v854, %v1158
      %1160 = vmatmul.bf16.gmra.mxu0 %v968
      %v1161 = vpop.f32.mrf.mxu0
      %v1162 = vadd.f32 %v854, %v1161
      %v1163 = vpop.f32.mrf.mxu0
      %v1164 = vadd.f32 %v854, %v1163
      %1165 = vmatmul.bf16.gmra.mxu0 %v970
      %v1166 = vpop.f32.mrf.mxu0
      %v1167 = vadd.f32 %v854, %v1166
      %v1168 = vpop.f32.mrf.mxu0
      %v1169 = vadd.f32 %v854, %v1168
      %1170 = vmatmul.bf16.gmra.mxu0 %v972
      %v1171 = vpop.f32.mrf.mxu0
      %v1172 = vadd.f32 %v854, %v1171
      %v1173 = vpop.f32.mrf.mxu0
      %v1174 = vadd.f32 %v854, %v1173
      %1175 = vmatmul.bf16.gmra.mxu0 %v974
      %v1176 = vpop.f32.mrf.mxu0
      %v1177 = vadd.f32 %v854, %v1176
      %v1178 = vpop.f32.mrf.mxu0
      %v1179 = vadd.f32 %v854, %v1178
      %1180 = vmatmul.bf16.gmra.mxu0 %v976
      %v1181 = vpop.f32.mrf.mxu0
      %v1182 = vadd.f32 %v854, %v1181
      %v1183 = vpop.f32.mrf.mxu0
      %v1184 = vadd.f32 %v854, %v1183
      %1185 = vmatmul.bf16.gmra.mxu0 %v978
      %v1186 = vpop.f32.mrf.mxu0
      %v1187 = vadd.f32 %v854, %v1186
      %v1188 = vpop.f32.mrf.mxu0
      %v1189 = vadd.f32 %v854, %v1188
      %1190 = vmatmul.bf16.gmra.mxu0 %v980
      %v1191 = vpop.f32.mrf.mxu0
      %v1192 = vadd.f32 %v854, %v1191
      %v1193 = vpop.f32.mrf.mxu0
      %v1194 = vadd.f32 %v854, %v1193
      %1195 = vmatmul.bf16.gmra.mxu0 %v982
      %v1196 = vpop.f32.mrf.mxu0
      %v1197 = vadd.f32 %v854, %v1196
      %v1198 = vpop.f32.mrf.mxu0
      %v1199 = vadd.f32 %v854, %v1198
      %1200 = vdwg.mxu0
      %1201 = vmatpush.bf16.msra.mxu0 %v1095
      %1202 = vmatpush.bf16.msra.mxu0 %v1094
      %1203 = vmatpush.bf16.msra.mxu0 %v1093
      %1204 = vmatpush.bf16.msra.mxu0 %v1092
      %1205 = vmatpush.bf16.msra.mxu0 %v1091
      %1206 = vmatpush.bf16.msra.mxu0 %v1090
      %1207 = vmatpush.bf16.msra.mxu0 %v1089
      %1208 = vmatpush.bf16.msra.mxu0 %v1088
      %1209 = vmatmul.bf16.gmra.mxu0 %v953
      %v1210 = vpop.f32.mrf.mxu0
      %v1211 = vadd.f32 %v1122, %v1210
      %v1212 = vpop.f32.mrf.mxu0
      %v1213 = vadd.f32 %v1124, %v1212
      %1214 = vmatmul.bf16.gmra.mxu0 %v955
      %v1215 = vpop.f32.mrf.mxu0
      %v1216 = vadd.f32 %v1127, %v1215
      %v1217 = vpop.f32.mrf.mxu0
      %v1218 = vadd.f32 %v1129, %v1217
      %1219 = vmatmul.bf16.gmra.mxu0 %v957
      %v1220 = vpop.f32.mrf.mxu0
      %v1221 = vadd.f32 %v1132, %v1220
      %v1222 = vpop.f32.mrf.mxu0
      %v1223 = vadd.f32 %v1134, %v1222
      %1224 = vmatmul.bf16.gmra.mxu0 %v959
      %v1225 = vpop.f32.mrf.mxu0
      %v1226 = vadd.f32 %v1137, %v1225
      %v1227 = vpop.f32.mrf.mxu0
      %v1228 = vadd.f32 %v1139, %v1227
      %1229 = vmatmul.bf16.gmra.mxu0 %v961
      %v1230 = vpop.f32.mrf.mxu0
      %v1231 = vadd.f32 %v1142, %v1230
      %v1232 = vpop.f32.mrf.mxu0
      %v1233 = vadd.f32 %v1144, %v1232
      %1234 = vmatmul.bf16.gmra.mxu0 %v963
      %v1235 = vpop.f32.mrf.mxu0
      %v1236 = vadd.f32 %v1147, %v1235
      %v1237 = vpop.f32.mrf.mxu0
      %v1238 = vadd.f32 %v1149, %v1237
      %1239 = vmatmul.bf16.gmra.mxu0 %v965
      %v1240 = vpop.f32.mrf.mxu0
      %v1241 = vadd.f32 %v1152, %v1240
      %v1242 = vpop.f32.mrf.mxu0
      %v1243 = vadd.f32 %v1154, %v1242
      %1244 = vmatmul.bf16.gmra.mxu0 %v967
      %v1245 = vpop.f32.mrf.mxu0
      %v1246 = vadd.f32 %v1157, %v1245
      %v1247 = vpop.f32.mrf.mxu0
      %v1248 = vadd.f32 %v1159, %v1247
      %1249 = vmatmul.bf16.gmra.mxu0 %v969
      %v1250 = vpop.f32.mrf.mxu0
      %v1251 = vadd.f32 %v1162, %v1250
      %v1252 = vpop.f32.mrf.mxu0
      %v1253 = vadd.f32 %v1164, %v1252
      %1254 = vmatmul.bf16.gmra.mxu0 %v971
      %v1255 = vpop.f32.mrf.mxu0
      %v1256 = vadd.f32 %v1167, %v1255
      %v1257 = vpop.f32.mrf.mxu0
      %v1258 = vadd.f32 %v1169, %v1257
      %1259 = vmatmul.bf16.gmra.mxu0 %v973
      %v1260 = vpop.f32.mrf.mxu0
      %v1261 = vadd.f32 %v1172, %v1260
      %v1262 = vpop.f32.mrf.mxu0
      %v1263 = vadd.f32 %v1174, %v1262
      %1264 = vmatmul.bf16.gmra.mxu0 %v975
      %v1265 = vpop.f32.mrf.mxu0
      %v1266 = vadd.f32 %v1177, %v1265
      %v1267 = vpop.f32.mrf.mxu0
      %v1268 = vadd.f32 %v1179, %v1267
      %1269 = vmatmul.bf16.gmra.mxu0 %v977
      %v1270 = vpop.f32.mrf.mxu0
      %v1271 = vadd.f32 %v1182, %v1270
      %v1272 = vpop.f32.mrf.mxu0
      %v1273 = vadd.f32 %v1184, %v1272
      %1274 = vmatmul.bf16.gmra.mxu0 %v979
      %v1275 = vpop.f32.mrf.mxu0
      %v1276 = vadd.f32 %v1187, %v1275
      %v1277 = vpop.f32.mrf.mxu0
      %v1278 = vadd.f32 %v1189, %v1277
      %1279 = vmatmul.bf16.gmra.mxu0 %v981
      %v1280 = vpop.f32.mrf.mxu0
      %v1281 = vadd.f32 %v1192, %v1280
      %v1282 = vpop.f32.mrf.mxu0
      %v1283 = vadd.f32 %v1194, %v1282
      %1284 = vmatmul.bf16.gmra.mxu0 %v983
      %v1285 = vpop.f32.mrf.mxu0
      %v1286 = vadd.f32 %v1197, %v1285
      %v1287 = vpop.f32.mrf.mxu0
      %v1288 = vadd.f32 %v1199, %v1287
      %1289 = vdwg.mxu0
      %vm1290 = vcmp.gt.f32.partialorder %v1211, 0.0
      %vm1291 = vcmp.gt.f32.partialorder %v1213, 0.0
      %vm1292 = vcmp.gt.f32.partialorder %v1216, 0.0
      %vm1293 = vcmp.gt.f32.partialorder %v1218, 0.0
      %vm1294 = vcmp.gt.f32.partialorder %v1221, 0.0
      %vm1295 = vcmp.gt.f32.partialorder %v1223, 0.0
      %vm1296 = vcmp.gt.f32.partialorder %v1226, 0.0
      %vm1297 = vcmp.gt.f32.partialorder %v1228, 0.0
      %vm1298 = vcmp.gt.f32.partialorder %v1231, 0.0
      %vm1299 = vcmp.gt.f32.partialorder %v1233, 0.0
      %vm1300 = vcmp.gt.f32.partialorder %v1236, 0.0
      %vm1301 = vcmp.gt.f32.partialorder %v1238, 0.0
      %vm1302 = vcmp.gt.f32.partialorder %v1241, 0.0
      %vm1303 = vcmp.gt.f32.partialorder %v1243, 0.0
      %vm1304 = vcmp.gt.f32.partialorder %v1246, 0.0
      %vm1305 = vcmp.gt.f32.partialorder %v1248, 0.0
      %vm1306 = vcmp.gt.f32.partialorder %v1251, 0.0
      %vm1307 = vcmp.gt.f32.partialorder %v1253, 0.0
      %vm1308 = vcmp.gt.f32.partialorder %v1256, 0.0
      %vm1309 = vcmp.gt.f32.partialorder %v1258, 0.0
      %vm1310 = vcmp.gt.f32.partialorder %v1261, 0.0
      %vm1311 = vcmp.gt.f32.partialorder %v1263, 0.0
      %vm1312 = vcmp.gt.f32.partialorder %v1266, 0.0
      %vm1313 = vcmp.gt.f32.partialorder %v1268, 0.0
      %vm1314 = vcmp.gt.f32.partialorder %v1271, 0.0
      %vm1315 = vcmp.gt.f32.partialorder %v1273, 0.0
      %vm1316 = vcmp.gt.f32.partialorder %v1276, 0.0
      %vm1317 = vcmp.gt.f32.partialorder %v1278, 0.0
      %vm1318 = vcmp.gt.f32.partialorder %v1281, 0.0
      %vm1319 = vcmp.gt.f32.partialorder %v1283, 0.0
      %vm1320 = vcmp.gt.f32.partialorder %v1286, 0.0
      %vm1321 = vcmp.gt.f32.partialorder %v1288, 0.0
      %v1322 = vmul.f32 %v1211, 0.01
      %v1323 = vmul.f32 %v1213, 0.01
      %v1324 = vmul.f32 %v1216, 0.01
      %v1325 = vmul.f32 %v1218, 0.01
      %v1326 = vmul.f32 %v1221, 0.01
      %v1327 = vmul.f32 %v1223, 0.01
      %v1328 = vmul.f32 %v1226, 0.01
      %v1329 = vmul.f32 %v1228, 0.01
      %v1330 = vmul.f32 %v1231, 0.01
      %v1331 = vmul.f32 %v1233, 0.01
      %v1332 = vmul.f32 %v1236, 0.01
      %v1333 = vmul.f32 %v1238, 0.01
      %v1334 = vmul.f32 %v1241, 0.01
      %v1335 = vmul.f32 %v1243, 0.01
      %v1336 = vmul.f32 %v1246, 0.01
      %v1337 = vmul.f32 %v1248, 0.01
      %v1338 = vmul.f32 %v1251, 0.01
      %v1339 = vmul.f32 %v1253, 0.01
      %v1340 = vmul.f32 %v1256, 0.01
      %v1341 = vmul.f32 %v1258, 0.01
      %v1342 = vmul.f32 %v1261, 0.01
      %v1343 = vmul.f32 %v1263, 0.01
      %v1344 = vmul.f32 %v1266, 0.01
      %v1345 = vmul.f32 %v1268, 0.01
      %v1346 = vmul.f32 %v1271, 0.01
      %v1347 = vmul.f32 %v1273, 0.01
      %v1348 = vmul.f32 %v1276, 0.01
      %v1349 = vmul.f32 %v1278, 0.01
      %v1350 = vmul.f32 %v1281, 0.01
      %v1351 = vmul.f32 %v1283, 0.01
      %v1352 = vmul.f32 %v1286, 0.01
      %v1353 = vmul.f32 %v1288, 0.01
      %v1354 = vsel %vm1290, %v1211, %v1322
      %v1355 = vsel %vm1291, %v1213, %v1323
      %v1356 = vsel %vm1292, %v1216, %v1324
      %v1357 = vsel %vm1293, %v1218, %v1325
      %v1358 = vsel %vm1294, %v1221, %v1326
      %v1359 = vsel %vm1295, %v1223, %v1327
      %v1360 = vsel %vm1296, %v1226, %v1328
      %v1361 = vsel %vm1297, %v1228, %v1329
      %v1362 = vsel %vm1298, %v1231, %v1330
      %v1363 = vsel %vm1299, %v1233, %v1331
      %v1364 = vsel %vm1300, %v1236, %v1332
      %v1365 = vsel %vm1301, %v1238, %v1333
      %v1366 = vsel %vm1302, %v1241, %v1334
      %v1367 = vsel %vm1303, %v1243, %v1335
      %v1368 = vsel %vm1304, %v1246, %v1336
      %v1369 = vsel %vm1305, %v1248, %v1337
      %v1370 = vsel %vm1306, %v1251, %v1338
      %v1371 = vsel %vm1307, %v1253, %v1339
      %v1372 = vsel %vm1308, %v1256, %v1340
      %v1373 = vsel %vm1309, %v1258, %v1341
      %v1374 = vsel %vm1310, %v1261, %v1342
      %v1375 = vsel %vm1311, %v1263, %v1343
      %v1376 = vsel %vm1312, %v1266, %v1344
      %v1377 = vsel %vm1313, %v1268, %v1345
      %v1378 = vsel %vm1314, %v1271, %v1346
      %v1379 = vsel %vm1315, %v1273, %v1347
      %v1380 = vsel %vm1316, %v1276, %v1348
      %v1381 = vsel %vm1317, %v1278, %v1349
      %v1382 = vsel %vm1318, %v1281, %v1350
      %v1383 = vsel %vm1319, %v1283, %v1351
      %v1384 = vsel %vm1320, %v1286, %v1352
      %v1385 = vsel %vm1321, %v1288, %v1353
      %v1386 = vpack.c.bf16 %v1354, %v1354
      %v1387 = vpack.c.bf16 %v1355, %v1355
      %v1388 = vpack.c.bf16 %v1356, %v1356
      %v1389 = vpack.c.bf16 %v1357, %v1357
      %v1390 = vpack.c.bf16 %v1358, %v1358
      %v1391 = vpack.c.bf16 %v1359, %v1359
      %v1392 = vpack.c.bf16 %v1360, %v1360
      %v1393 = vpack.c.bf16 %v1361, %v1361
      %v1394 = vpack.c.bf16 %v1362, %v1362
      %v1395 = vpack.c.bf16 %v1363, %v1363
      %v1396 = vpack.c.bf16 %v1364, %v1364
      %v1397 = vpack.c.bf16 %v1365, %v1365
      %v1398 = vpack.c.bf16 %v1366, %v1366
      %v1399 = vpack.c.bf16 %v1367, %v1367
      %v1400 = vpack.c.bf16 %v1368, %v1368
      %v1401 = vpack.c.bf16 %v1369, %v1369
      %v1402 = vpack.c.bf16 %v1370, %v1370
      %v1403 = vpack.c.bf16 %v1371, %v1371
      %v1404 = vpack.c.bf16 %v1372, %v1372
      %v1405 = vpack.c.bf16 %v1373, %v1373
      %v1406 = vpack.c.bf16 %v1374, %v1374
      %v1407 = vpack.c.bf16 %v1375, %v1375
      %v1408 = vpack.c.bf16 %v1376, %v1376
      %v1409 = vpack.c.bf16 %v1377, %v1377
      %v1410 = vpack.c.bf16 %v1378, %v1378
      %v1411 = vpack.c.bf16 %v1379, %v1379
      %v1412 = vpack.c.bf16 %v1380, %v1380
      %v1413 = vpack.c.bf16 %v1381, %v1381
      %v1414 = vpack.c.bf16 %v1382, %v1382
      %v1415 = vpack.c.bf16 %v1383, %v1383
      %v1416 = vpack.c.bf16 %v1384, %v1384
      %v1417 = vpack.c.bf16 %v1385, %v1385
      %s1418 = smul.addr %s783, 4
      %s1419 = scalar_lea.vmem [#allocation3], %s1418
      %1420 = vst [vmem:[%s1419] sm:$0xf] %v1386
      %1421 = vst [vmem:[%s1419 + $0x4] sm:$0xf] %v1387
      %1422 = vst [vmem:[%s1419 + $0x8] sm:$0xf] %v1388
      %1423 = vst [vmem:[%s1419 + $0xc] sm:$0xf] %v1389
      %1424 = vst [vmem:[%s1419 + $0x10] sm:$0xf] %v1390
      %1425 = vst [vmem:[%s1419 + $0x14] sm:$0xf] %v1391
      %1426 = vst [vmem:[%s1419 + $0x18] sm:$0xf] %v1392
      %1427 = vst [vmem:[%s1419 + $0x1c] sm:$0xf] %v1393
      %1428 = vst [vmem:[%s1419 + $0x20] sm:$0xf] %v1394
      %1429 = vst [vmem:[%s1419 + $0x24] sm:$0xf] %v1395
      %1430 = vst [vmem:[%s1419 + $0x28] sm:$0xf] %v1396
      %1431 = vst [vmem:[%s1419 + $0x2c] sm:$0xf] %v1397
      %1432 = vst [vmem:[%s1419 + $0x30] sm:$0xf] %v1398
      %1433 = vst [vmem:[%s1419 + $0x34] sm:$0xf] %v1399
      %1434 = vst [vmem:[%s1419 + $0x38] sm:$0xf] %v1400
      %1435 = vst [vmem:[%s1419 + $0x3c] sm:$0xf] %v1401
      %1436 = vst [vmem:[%s1419 + $0x40] sm:$0xf] %v1402
      %1437 = vst [vmem:[%s1419 + $0x44] sm:$0xf] %v1403
      %1438 = vst [vmem:[%s1419 + $0x48] sm:$0xf] %v1404
      %1439 = vst [vmem:[%s1419 + $0x4c] sm:$0xf] %v1405
      %1440 = vst [vmem:[%s1419 + $0x50] sm:$0xf] %v1406
      %1441 = vst [vmem:[%s1419 + $0x54] sm:$0xf] %v1407
      %1442 = vst [vmem:[%s1419 + $0x58] sm:$0xf] %v1408
      %1443 = vst [vmem:[%s1419 + $0x5c] sm:$0xf] %v1409
      %1444 = vst [vmem:[%s1419 + $0x60] sm:$0xf] %v1410
      %1445 = vst [vmem:[%s1419 + $0x64] sm:$0xf] %v1411
      %1446 = vst [vmem:[%s1419 + $0x68] sm:$0xf] %v1412
      %1447 = vst [vmem:[%s1419 + $0x6c] sm:$0xf] %v1413
      %1448 = vst [vmem:[%s1419 + $0x70] sm:$0xf] %v1414
      %1449 = vst [vmem:[%s1419 + $0x74] sm:$0xf] %v1415
      %1450 = vst [vmem:[%s1419 + $0x78] sm:$0xf] %v1416
      %1451 = vst [vmem:[%s1419 + $0x7c] sm:$0xf] %v1417
      %p1452 = scmp.eq.s32.totalorder %s24, 1
      %p1453 = pnand %p1452, %p293
      %p1454 = pneg %p1453
      // Predicated region
      $region95: #{_forward_impl.1} parent=47 // pred_check
        _
      $region96: #{_forward_impl.1} parent=47 // pred_check_branch
        %1456 = sbr.rel (%p1453) target = $region98
      $region97: #{_forward_impl.1} parent=47 // pred_region
        %v1457 = vld [vmem:[%s0] sm:$0xff]
        %v1458 = vld [vmem:[#allocation3] sm:$0xf]
        %v1459 = vld [vmem:[#allocation3 + $0x4] sm:$0xf]
        %v1460 = vld [vmem:[#allocation3 + $0x8] sm:$0xf]
        %v1461 = vld [vmem:[#allocation3 + $0xc] sm:$0xf]
        %v1462 = vld [vmem:[#allocation3 + $0x10] sm:$0xf]
        %v1463 = vld [vmem:[#allocation3 + $0x14] sm:$0xf]
        %v1464 = vld [vmem:[#allocation3 + $0x18] sm:$0xf]
        %v1465 = vld [vmem:[#allocation3 + $0x1c] sm:$0xf]
        %v1466 = vld [vmem:[#allocation3 + $0x20] sm:$0xf]
        %v1467 = vld [vmem:[#allocation3 + $0x24] sm:$0xf]
        %v1468 = vld [vmem:[#allocation3 + $0x28] sm:$0xf]
        %v1469 = vld [vmem:[#allocation3 + $0x2c] sm:$0xf]
        %v1470 = vld [vmem:[#allocation3 + $0x30] sm:$0xf]
        %v1471 = vld [vmem:[#allocation3 + $0x34] sm:$0xf]
        %v1472 = vld [vmem:[#allocation3 + $0x38] sm:$0xf]
        %v1473 = vld [vmem:[#allocation3 + $0x3c] sm:$0xf]
        %v1474 = vld [vmem:[#allocation3 + $0x40] sm:$0xf]
        %v1475 = vld [vmem:[#allocation3 + $0x44] sm:$0xf]
        %v1476 = vld [vmem:[#allocation3 + $0x48] sm:$0xf]
        %v1477 = vld [vmem:[#allocation3 + $0x4c] sm:$0xf]
        %v1478 = vld [vmem:[#allocation3 + $0x50] sm:$0xf]
        %v1479 = vld [vmem:[#allocation3 + $0x54] sm:$0xf]
        %v1480 = vld [vmem:[#allocation3 + $0x58] sm:$0xf]
        %v1481 = vld [vmem:[#allocation3 + $0x5c] sm:$0xf]
        %v1482 = vld [vmem:[#allocation3 + $0x60] sm:$0xf]
        %v1483 = vld [vmem:[#allocation3 + $0x64] sm:$0xf]
        %v1484 = vld [vmem:[#allocation3 + $0x68] sm:$0xf]
        %v1485 = vld [vmem:[#allocation3 + $0x6c] sm:$0xf]
        %v1486 = vld [vmem:[#allocation3 + $0x70] sm:$0xf]
        %v1487 = vld [vmem:[#allocation3 + $0x74] sm:$0xf]
        %v1488 = vld [vmem:[#allocation3 + $0x78] sm:$0xf]
        %v1489 = vld [vmem:[#allocation3 + $0x7c] sm:$0xf]
        %v1491 = vunpack.c.l.b16 %v1457
        %v1492 = vunpack.c.h.b16 %v1457
        %v1493 = vpack.c.b16 %v1491, %v1491
        %v1494 = vpack.c.b16 %v1492, %v1492
        %v1529 = vunpack.c.l.b16 %v1458
        %v1530 = vunpack.c.l.b16 %v1459
        %v1531 = vunpack.c.l.b16 %v1460
        %v1532 = vunpack.c.l.b16 %v1461
        %v1533 = vunpack.c.l.b16 %v1462
        %v1534 = vunpack.c.l.b16 %v1463
        %v1535 = vunpack.c.l.b16 %v1464
        %v1536 = vunpack.c.l.b16 %v1465
        %v1537 = vunpack.c.l.b16 %v1466
        %v1538 = vunpack.c.l.b16 %v1467
        %v1539 = vunpack.c.l.b16 %v1468
        %v1540 = vunpack.c.l.b16 %v1469
        %v1541 = vunpack.c.l.b16 %v1470
        %v1542 = vunpack.c.l.b16 %v1471
        %v1543 = vunpack.c.l.b16 %v1472
        %v1544 = vunpack.c.l.b16 %v1473
        %v1545 = vunpack.c.l.b16 %v1474
        %v1546 = vunpack.c.l.b16 %v1475
        %v1547 = vunpack.c.l.b16 %v1476
        %v1548 = vunpack.c.l.b16 %v1477
        %v1549 = vunpack.c.l.b16 %v1478
        %v1550 = vunpack.c.l.b16 %v1479
        %v1551 = vunpack.c.l.b16 %v1480
        %v1552 = vunpack.c.l.b16 %v1481
        %v1553 = vunpack.c.l.b16 %v1482
        %v1554 = vunpack.c.l.b16 %v1483
        %v1555 = vunpack.c.l.b16 %v1484
        %v1556 = vunpack.c.l.b16 %v1485
        %v1557 = vunpack.c.l.b16 %v1486
        %v1558 = vunpack.c.l.b16 %v1487
        %v1559 = vunpack.c.l.b16 %v1488
        %v1560 = vunpack.c.l.b16 %v1489
        %v1561 = vpack.c.b16 %v1530, %v1529
        %v1562 = vpack.c.b16 %v1532, %v1531
        %v1563 = vpack.c.b16 %v1534, %v1533
        %v1564 = vpack.c.b16 %v1536, %v1535
        %v1565 = vpack.c.b16 %v1538, %v1537
        %v1566 = vpack.c.b16 %v1540, %v1539
        %v1567 = vpack.c.b16 %v1542, %v1541
        %v1568 = vpack.c.b16 %v1544, %v1543
        %v1569 = vpack.c.b16 %v1546, %v1545
        %v1570 = vpack.c.b16 %v1548, %v1547
        %v1571 = vpack.c.b16 %v1550, %v1549
        %v1572 = vpack.c.b16 %v1552, %v1551
        %v1573 = vpack.c.b16 %v1554, %v1553
        %v1574 = vpack.c.b16 %v1556, %v1555
        %v1575 = vpack.c.b16 %v1558, %v1557
        %v1576 = vpack.c.b16 %v1560, %v1559
        %1593 = vmatpush.bf16.msra.mxu0 %v1568
        %1594 = vmatpush.bf16.msra.mxu0 %v1567
        %1595 = vmatpush.bf16.msra.mxu0 %v1566
        %1596 = vmatpush.bf16.msra.mxu0 %v1565
        %1597 = vmatpush.bf16.msra.mxu0 %v1564
        %1598 = vmatpush.bf16.msra.mxu0 %v1563
        %1599 = vmatpush.bf16.msra.mxu0 %v1562
        %1600 = vmatpush.bf16.msra.mxu0 %v1561
        %1601 = vmatmul.bf16.gmra.mxu0 %v1493
        %v1602 = vpop.f32.mrf.mxu0
        %v1603 = vadd.f32 0.0, %v1602
        %v1604 = vpop.f32.mrf.mxu0
        %1605 = vdwg.mxu0
        %1606 = vmatpush.bf16.msra.mxu0 %v1576
        %1607 = vmatpush.bf16.msra.mxu0 %v1575
        %1608 = vmatpush.bf16.msra.mxu0 %v1574
        %1609 = vmatpush.bf16.msra.mxu0 %v1573
        %1610 = vmatpush.bf16.msra.mxu0 %v1572
        %1611 = vmatpush.bf16.msra.mxu0 %v1571
        %1612 = vmatpush.bf16.msra.mxu0 %v1570
        %1613 = vmatpush.bf16.msra.mxu0 %v1569
        %1614 = vmatmul.bf16.gmra.mxu0 %v1494
        %v1615 = vpop.f32.mrf.mxu0
        %v1616 = vadd.f32 %v1603, %v1615
        %v1617 = vpop.f32.mrf.mxu0
        %1618 = vdwg.mxu0
        %v1619 = vpack.c.bf16 %v1616, %v1616
        %v1620 = vld [vmem:[%s5] sm:$0xf]
        %v1621 = vld [vmem:[%s5 + $0x4] sm:$0xf]
        %v1622 = vld [vmem:[%s5 + $0x8] sm:$0xf]
        %v1623 = vld [vmem:[%s5 + $0xc] sm:$0xf]
        %v1624 = vld [vmem:[%s5 + $0x10] sm:$0xf]
        %v1625 = vld [vmem:[%s5 + $0x14] sm:$0xf]
        %v1626 = vld [vmem:[%s5 + $0x18] sm:$0xf]
        %v1627 = vld [vmem:[%s5 + $0x1c] sm:$0xf]
        %v1628 = vld [vmem:[%s5 + $0x20] sm:$0xf]
        %v1629 = vld [vmem:[%s5 + $0x24] sm:$0xf]
        %v1630 = vld [vmem:[%s5 + $0x28] sm:$0xf]
        %v1631 = vld [vmem:[%s5 + $0x2c] sm:$0xf]
        %v1632 = vld [vmem:[%s5 + $0x30] sm:$0xf]
        %v1633 = vld [vmem:[%s5 + $0x34] sm:$0xf]
        %v1634 = vld [vmem:[%s5 + $0x38] sm:$0xf]
        %v1635 = vld [vmem:[%s5 + $0x3c] sm:$0xf]
        %v1636 = vld [vmem:[%s6] sm:$0x1]
        %v1638 = vperm.slane %v1636, 0
        %v1656 = vunpack.c.l.b16 %v1620
        %v1657 = vunpack.c.l.b16 %v1621
        %v1658 = vunpack.c.l.b16 %v1622
        %v1659 = vunpack.c.l.b16 %v1623
        %v1660 = vunpack.c.l.b16 %v1624
        %v1661 = vunpack.c.l.b16 %v1625
        %v1662 = vunpack.c.l.b16 %v1626
        %v1663 = vunpack.c.l.b16 %v1627
        %v1664 = vunpack.c.l.b16 %v1628
        %v1665 = vunpack.c.l.b16 %v1629
        %v1666 = vunpack.c.l.b16 %v1630
        %v1667 = vunpack.c.l.b16 %v1631
        %v1668 = vunpack.c.l.b16 %v1632
        %v1669 = vunpack.c.l.b16 %v1633
        %v1670 = vunpack.c.l.b16 %v1634
        %v1671 = vunpack.c.l.b16 %v1635
        %v1672 = vpack.c.b16 %v1657, %v1656
        %v1673 = vpack.c.b16 %v1659, %v1658
        %v1674 = vpack.c.b16 %v1661, %v1660
        %v1675 = vpack.c.b16 %v1663, %v1662
        %v1676 = vpack.c.b16 %v1665, %v1664
        %v1677 = vpack.c.b16 %v1667, %v1666
        %v1678 = vpack.c.b16 %v1669, %v1668
        %v1679 = vpack.c.b16 %v1671, %v1670
        %1688 = vmatpush.bf16.msra.mxu0 %v1679
        %1689 = vmatpush.bf16.msra.mxu0 %v1678
        %1690 = vmatpush.bf16.msra.mxu0 %v1677
        %1691 = vmatpush.bf16.msra.mxu0 %v1676
        %1692 = vmatpush.bf16.msra.mxu0 %v1675
        %1693 = vmatpush.bf16.msra.mxu0 %v1674
        %1694 = vmatpush.bf16.msra.mxu0 %v1673
        %1695 = vmatpush.bf16.msra.mxu0 %v1672
        %1696 = vmatmul.bf16.gmra.mxu0 %v1619
        %v1697 = vpop.f32.mrf.mxu0
        %v1698 = vadd.f32 %v1638, %v1697
        %v1699 = vpop.f32.mrf.mxu0
        %1700 = vdwg.mxu0
        %vm1701 = vcmp.gt.f32.partialorder %v1698, 0.0
        %v1702 = vmul.f32 %v1698, 0.01
        %v1703 = vsel %vm1701, %v1698, %v1702
        %v1704 = vpack.c.bf16 %v1703, %v1703
        %s1705 = scalar_lea.vmem %s5, 64
        %v1706 = vld [vmem:[%s1705] sm:$0xf]
        %v1707 = vld [vmem:[%s1705 + $0x4] sm:$0xf]
        %v1708 = vld [vmem:[%s1705 + $0x8] sm:$0xf]
        %v1709 = vld [vmem:[%s1705 + $0xc] sm:$0xf]
        %v1710 = vld [vmem:[%s1705 + $0x10] sm:$0xf]
        %v1711 = vld [vmem:[%s1705 + $0x14] sm:$0xf]
        %v1712 = vld [vmem:[%s1705 + $0x18] sm:$0xf]
        %v1713 = vld [vmem:[%s1705 + $0x1c] sm:$0xf]
        %v1714 = vld [vmem:[%s1705 + $0x20] sm:$0xf]
        %v1715 = vld [vmem:[%s1705 + $0x24] sm:$0xf]
        %v1716 = vld [vmem:[%s1705 + $0x28] sm:$0xf]
        %v1717 = vld [vmem:[%s1705 + $0x2c] sm:$0xf]
        %v1718 = vld [vmem:[%s1705 + $0x30] sm:$0xf]
        %v1719 = vld [vmem:[%s1705 + $0x34] sm:$0xf]
        %v1720 = vld [vmem:[%s1705 + $0x38] sm:$0xf]
        %v1721 = vld [vmem:[%s1705 + $0x3c] sm:$0xf]
        %s1722 = scalar_lea.vmem %s6, 1
        %v1723 = vld [vmem:[%s1722] sm:$0x1]
        %v1725 = vperm.slane %v1723, 0
        %v1743 = vunpack.c.l.b16 %v1706
        %v1744 = vunpack.c.l.b16 %v1707
        %v1745 = vunpack.c.l.b16 %v1708
        %v1746 = vunpack.c.l.b16 %v1709
        %v1747 = vunpack.c.l.b16 %v1710
        %v1748 = vunpack.c.l.b16 %v1711
        %v1749 = vunpack.c.l.b16 %v1712
        %v1750 = vunpack.c.l.b16 %v1713
        %v1751 = vunpack.c.l.b16 %v1714
        %v1752 = vunpack.c.l.b16 %v1715
        %v1753 = vunpack.c.l.b16 %v1716
        %v1754 = vunpack.c.l.b16 %v1717
        %v1755 = vunpack.c.l.b16 %v1718
        %v1756 = vunpack.c.l.b16 %v1719
        %v1757 = vunpack.c.l.b16 %v1720
        %v1758 = vunpack.c.l.b16 %v1721
        %v1759 = vpack.c.b16 %v1744, %v1743
        %v1760 = vpack.c.b16 %v1746, %v1745
        %v1761 = vpack.c.b16 %v1748, %v1747
        %v1762 = vpack.c.b16 %v1750, %v1749
        %v1763 = vpack.c.b16 %v1752, %v1751
        %v1764 = vpack.c.b16 %v1754, %v1753
        %v1765 = vpack.c.b16 %v1756, %v1755
        %v1766 = vpack.c.b16 %v1758, %v1757
        %1775 = vmatpush.bf16.msra.mxu0 %v1766
        %1776 = vmatpush.bf16.msra.mxu0 %v1765
        %1777 = vmatpush.bf16.msra.mxu0 %v1764
        %1778 = vmatpush.bf16.msra.mxu0 %v1763
        %1779 = vmatpush.bf16.msra.mxu0 %v1762
        %1780 = vmatpush.bf16.msra.mxu0 %v1761
        %1781 = vmatpush.bf16.msra.mxu0 %v1760
        %1782 = vmatpush.bf16.msra.mxu0 %v1759
        %1783 = vmatmul.bf16.gmra.mxu0 %v1704
        %v1784 = vpop.f32.mrf.mxu0
        %v1785 = vadd.f32 %v1725, %v1784
        %v1786 = vpop.f32.mrf.mxu0
        %1787 = vdwg.mxu0
        %vm1788 = vcmp.gt.f32.partialorder %v1785, 0.0
        %v1789 = vmul.f32 %v1785, 0.01
        %v1790 = vsel %vm1788, %v1785, %v1789
        %v1791 = vpack.c.bf16 %v1790, %v1790
        %v1792 = vld [vmem:[%s7] sm:$0xf]
        %v1793 = vld [vmem:[%s7 + $0x4] sm:$0xf]
        %v1794 = vld [vmem:[%s7 + $0x8] sm:$0xf]
        %v1795 = vld [vmem:[%s7 + $0xc] sm:$0xf]
        %v1796 = vld [vmem:[%s7 + $0x10] sm:$0xf]
        %v1797 = vld [vmem:[%s7 + $0x14] sm:$0xf]
        %v1798 = vld [vmem:[%s7 + $0x18] sm:$0xf]
        %v1799 = vld [vmem:[%s7 + $0x1c] sm:$0xf]
        %v1800 = vld [vmem:[%s7 + $0x20] sm:$0xf]
        %v1801 = vld [vmem:[%s7 + $0x24] sm:$0xf]
        %v1802 = vld [vmem:[%s7 + $0x28] sm:$0xf]
        %v1803 = vld [vmem:[%s7 + $0x2c] sm:$0xf]
        %v1804 = vld [vmem:[%s7 + $0x30] sm:$0xf]
        %v1805 = vld [vmem:[%s7 + $0x34] sm:$0xf]
        %v1806 = vld [vmem:[%s7 + $0x38] sm:$0xf]
        %v1807 = vld [vmem:[%s7 + $0x3c] sm:$0xf]
        %v1808 = vld [vmem:[%s8] sm:$0x1]
        %v1810 = vperm.slane %v1808, 0
        %v1828 = vunpack.c.l.b16 %v1792
        %v1829 = vunpack.c.l.b16 %v1793
        %v1830 = vunpack.c.l.b16 %v1794
        %v1831 = vunpack.c.l.b16 %v1795
        %v1832 = vunpack.c.l.b16 %v1796
        %v1833 = vunpack.c.l.b16 %v1797
        %v1834 = vunpack.c.l.b16 %v1798
        %v1835 = vunpack.c.l.b16 %v1799
        %v1836 = vunpack.c.l.b16 %v1800
        %v1837 = vunpack.c.l.b16 %v1801
        %v1838 = vunpack.c.l.b16 %v1802
        %v1839 = vunpack.c.l.b16 %v1803
        %v1840 = vunpack.c.l.b16 %v1804
        %v1841 = vunpack.c.l.b16 %v1805
        %v1842 = vunpack.c.l.b16 %v1806
        %v1843 = vunpack.c.l.b16 %v1807
        %v1844 = vpack.c.b16 %v1829, %v1828
        %v1845 = vpack.c.b16 %v1831, %v1830
        %v1846 = vpack.c.b16 %v1833, %v1832
        %v1847 = vpack.c.b16 %v1835, %v1834
        %v1848 = vpack.c.b16 %v1837, %v1836
        %v1849 = vpack.c.b16 %v1839, %v1838
        %v1850 = vpack.c.b16 %v1841, %v1840
        %v1851 = vpack.c.b16 %v1843, %v1842
        %1860 = vmatpush.bf16.msra.mxu0 %v1851
        %1861 = vmatpush.bf16.msra.mxu0 %v1850
        %1862 = vmatpush.bf16.msra.mxu0 %v1849
        %1863 = vmatpush.bf16.msra.mxu0 %v1848
        %1864 = vmatpush.bf16.msra.mxu0 %v1847
        %1865 = vmatpush.bf16.msra.mxu0 %v1846
        %1866 = vmatpush.bf16.msra.mxu0 %v1845
        %1867 = vmatpush.bf16.msra.mxu0 %v1844
        %1868 = vmatmul.bf16.gmra.mxu0 %v1791
        %v1869 = vpop.f32.mrf.mxu0
        %v1870 = vadd.f32 %v1810, %v1869
        %v1871 = vpop.f32.mrf.mxu0
        %1872 = vdwg.mxu0
        %1873 = vst [vmem:[%s9] sm:$0xff] %v1870
      $region98: #{_forward_impl.1} parent=47 // pred_fallthru
        _
      // Predicated region
      $region99: #{_forward_impl.1} parent=47 // pred_check
        %p1874 = pneg %p202
      $region100: #{_forward_impl.1} parent=47 // pred_check_branch
        %1876 = sbr.rel (%p1874) target = $region102
      $region101: #{_forward_impl.1} parent=47 // pred_region
        _
      $region102: #{_forward_impl.1} parent=47 // pred_fallthru
        _
      // Predicated region
      $region103: #{_forward_impl.1} parent=47 // pred_check
        %p1877 = pneg %p202
      $region104: #{_forward_impl.1} parent=47 // pred_check_branch
        %1879 = sbr.rel (%p1877) target = $region106
      $region105: #{_forward_impl.1} parent=47 // pred_region
        _
      $region106: #{_forward_impl.1} parent=47 // pred_fallthru
        _
    $region48: #{_forward_impl.1} parent=5 // pred_fallthru
      _
    %p1880 = scmp.le.s32.totalorder 2, %s15
    // Predicated region
    $region107: #{_forward_impl.1} parent=5 // pred_check
      %p1881 = pneg %p1880
    $region108: #{_forward_impl.1} parent=5 // pred_check_branch
      %1883 = sbr.rel (%p1881) target = $region110
    $region109: #{_forward_impl.1} parent=5 // pred_region
      %s1884 = ssub.s32 %s15, 2
    $region110: #{_forward_impl.1} parent=5 // pred_fallthru
      _
  $region6: #{_forward_impl.1} parent=0 // loop_footer
    %s19 = sadd.s32 1, %s15
  $region7: #{_forward_impl.1} parent=0 // loop_footer_branch
    %14 = sbr.rel target = $region3
  $region8: #{_forward_impl.1} parent=0 // loop_exit
    _
  %1885 = vsyncmov [#allocation5]
  %s1886 = vpop.sfrf %1885
  %p1887 = scmp.eq.s32.totalorder %s1886, 0
  %p1888 = pneg %p1887
  %1890 = shalt.err (%p1888)
  %s1891 = scalar_lea.sflag [#allocation5], 1
  %1892 = vsyncmov %s1891
  %s1893 = vpop.sfrf %1892
  %p1894 = scmp.eq.s32.totalorder %s1893, 0
  %p1895 = pneg %p1894
  %1897 = shalt.err (%p1895)

</llo_original>
